<compile_context>
chip_gen: v7x
topology: tpu7x:2x2x1
jax: 0.10.0
libtpu: 0.0.40
codegen_flags: <defaults>
</compile_context>

<pallas_src>
import jax
import jax.numpy as jnp
from jax.experimental import pallas as pl
from jax.experimental.pallas import tpu as pltpu

# ---------------- model sizes (small, consistent with the module) ----------------
TAM_VOCAB = 40
TAM_EMBEDDING = 32     # tam_embedding (module uses 100; scaled down)
HIDDEN_SIZE = 128      # hidden_size  (module uses 256; scaled down, lane aligned)
OUTPUT_SIZE = 2        # output_size
IND_UNK = 0
IND_PAD = 1

T = 8                  # sequence length
B = 4                  # batch size


# ---------------------------------- kernel ---------------------------------------
def gru_pool_kernel(emb_ref, wih_ref, bcomb_ref, whh_ref, bhn_ref, lens_ref,
                    pooled_ref, gi_ref):
    """Single invocation: fused input projection + unrolled GRU + masked max-pool.

    emb_ref:   (T*Bp, E)  bf16  gathered embeddings, time-major, batch padded
    wih_ref:   (E, 3H)    bf16  W_ih^T
    bcomb_ref: (1, 3H)    f32   b_ih with b_hh folded in for the r/z gates
    whh_ref:   (H, 3H)    bf16  W_hh^T
    bhn_ref:   (1, H)     f32   b_hh for the n-gate (applied inside r*(...))
    lens_ref:  (Bp, H)    i32   per-row sequence length, broadcast over lanes (1 vreg)
    pooled_ref:(Bp, H)    f32   output = max over valid timesteps of GRU outputs
    gi_ref:    (T*Bp, 3H) f32   VMEM scratch holding the hoisted input projection
    """
    Bp, H = pooled_ref.shape
    Tn = emb_ref.shape[0] // Bp

    # Hoisted input projection: one MXU matmul over all timesteps (no h dependence),
    # with b_ih (+ b_hh for r/z) fused in.  Lives in VMEM scratch for per-step slicing.
    gi_ref[...] = (
        jnp.dot(emb_ref[...], wih_ref[...], preferred_element_type=jnp.float32)
        + bcomb_ref[...]
    )

    whh = whh_ref[...]                   # (H, 3H) bf16, loop invariant (hoisted)
    bhn = bhn_ref[...]                   # (1, H)  f32
    lens = lens_ref[...]                 # (Bp, H) i32, one vreg, hoisted

    def step(t, carry):
        h, mx = carry
        row = pl.multiple_of(t * Bp, Bp)
        gi = gi_ref[pl.ds(row, Bp), :]                       # (Bp, 3H) f32

        # only the h-dependent matmul sits on the serial critical path (bf16 operands)
        gh = jnp.dot(h.astype(whh.dtype), whh,
                     preferred_element_type=jnp.float32)     # (Bp, 3H) f32

        r = jax.nn.sigmoid(gi[:, :H] + gh[:, :H])
        z = jax.nn.sigmoid(gi[:, H:2 * H] + gh[:, H:2 * H])
        n = jnp.tanh(gi[:, 2 * H:] + r * (gh[:, 2 * H:] + bhn))
        h_new = (1.0 - z) * n + z * h

        keep = lens > t                                      # one VPU compare / step
        # packed-sequence semantics: padded steps do not advance h
        h_out = jnp.where(keep, h_new, h)
        # pad_packed emits zeros at padded positions; max-pool sees those zeros
        mx_out = jnp.maximum(mx, jnp.where(keep, h_new, jnp.zeros_like(h_new)))
        return h_out, mx_out

    h0 = jnp.zeros((Bp, H), jnp.float32)
    mx0 = jnp.full((Bp, H), -jnp.inf, dtype=jnp.float32)
    _, mx_f = jax.lax.fori_loop(0, Tn, step, (h0, mx0), unroll=True)
    pooled_ref[...] = mx_f


def rnn_forward(X, lengths, params):
    """X: (T, B) int32 token ids, lengths: (B,) int32 valid lengths."""
    H = params["whh_t"].shape[0]
    E = params["wih_t"].shape[0]
    Tn, Bn = X.shape
    Bp = max(8, ((Bn + 7) // 8) * 8)                     # pad batch to a sublane tile

    X_pad = jnp.pad(X, ((0, 0), (0, Bp - Bn)), constant_values=IND_PAD)
    lengths_pad = jnp.pad(lengths, (0, Bp - Bn))         # padded rows get length 0

    # glue: embedding gather (data-dependent gather stays outside the kernel)
    vectors = jnp.take(params["emb"], X_pad, axis=0)                     # (T, Bp, E)
    emb_flat = vectors.reshape(Tn * Bp, E).astype(jnp.bfloat16)          # (T*Bp, E)

    # bf16 MXU operands; all accumulation / gate math stays f32 in-kernel
    wih = params["wih_t"].astype(jnp.bfloat16)                           # (E, 3H)
    whh = params["whh_t"].astype(jnp.bfloat16)                           # (H, 3H)

    # combined bias: b_ih everywhere, plus b_hh for the r/z gates (n-gate b_hh is
    # applied inside r*(...) per PyTorch GRU semantics)
    bcomb = (params["bih"] + params["bhh"].at[:, 2 * H:].set(0.0)).astype(jnp.float32)
    bhn = params["bhh"][:, 2 * H:].astype(jnp.float32)                   # (1, H)

    # per-row lengths broadcast to one lane-dense vreg (replaces the (T,Bp,H) mask)
    lens = jnp.broadcast_to(
        lengths_pad.astype(jnp.int32)[:, None], (Bp, H))                 # (Bp, H)

    grid_spec = pltpu.PrefetchScalarGridSpec(
        num_scalar_prefetch=0,
        grid=(1,),                                        # single invocation
        in_specs=[
            pl.BlockSpec((Tn * Bp, E), lambda i: (0, 0)),         # embeddings (bf16)
            pl.BlockSpec((E, 3 * H), lambda i: (0, 0)),           # W_ih^T (bf16)
            pl.BlockSpec((1, 3 * H), lambda i: (0, 0)),           # fused bias (f32)
            pl.BlockSpec((H, 3 * H), lambda i: (0, 0)),           # W_hh^T (bf16)
            pl.BlockSpec((1, H), lambda i: (0, 0)),               # b_hh n-gate (f32)
            pl.BlockSpec((Bp, H), lambda i: (0, 0)),              # lengths vreg (i32)
        ],
        out_specs=pl.BlockSpec((Bp, H), lambda i: (0, 0)),        # pooled, lane dense
        scratch_shapes=[pltpu.VMEM((Tn * Bp, 3 * H), jnp.float32)],  # gi_all scratch
    )

    pooled = pl.pallas_call(
        gru_pool_kernel,
        out_shape=jax.ShapeDtypeStruct((Bp, H), jnp.float32),
        grid_spec=grid_spec,
        compiler_params=pltpu.CompilerParams(
            dimension_semantics=("arbitrary",)),
    )(emb_flat, wih, bcomb, whh, bhn, lens)

    # glue: tiny (B, 2) final linear stays outside (lane-sparse output avoided)
    return pooled[:Bn] @ params["wlin_t"] + params["blin"]


# ------------------------------ pure-JAX reference -------------------------------
def rnn_forward_ref(X, lengths, params):
    vectors = jnp.take(params["emb"], X, axis=0).astype(jnp.float32)
    H = params["whh_t"].shape[0]
    mask = (jnp.arange(X.shape[0])[:, None] < lengths[None, :]).astype(jnp.float32)

    def step(h, inp):
        x, m = inp
        gi = x @ params["wih_t"] + params["bih"]
        gh = h @ params["whh_t"] + params["bhh"]
        r = jax.nn.sigmoid(gi[:, :H] + gh[:, :H])
        z = jax.nn.sigmoid(gi[:, H:2 * H] + gh[:, H:2 * H])
        n = jnp.tanh(gi[:, 2 * H:] + r * gh[:, 2 * H:])
        h_new = (1 - z) * n + z * h
        h_out = jnp.where(m[:, None] > 0, h_new, h)
        y = jnp.where(m[:, None] > 0, h_new, 0.0)
        return h_out, y

    _, ys = jax.lax.scan(step, jnp.zeros((X.shape[1], H), jnp.float32),
                         (vectors, mask))
    pooled = jnp.max(ys, axis=0)
    return pooled @ params["wlin_t"] + params["blin"]


# ----------------------------------- main -----------------------------------------
if __name__ == "__main__":
    key = jax.random.PRNGKey(0)
    k_emb, k_wih, k_whh, k_bih, k_bhh, k_wl, k_bl, k_x = jax.random.split(key, 8)

    H, E, O = HIDDEN_SIZE, TAM_EMBEDDING, OUTPUT_SIZE

    emb = jax.random.normal(k_emb, (TAM_VOCAB, E), jnp.float32) * 0.1
    emb = emb.at[IND_UNK].set(0.0).at[IND_PAD].set(0.0)   # zero unk/pad rows

    scale = 1.0 / jnp.sqrt(jnp.float32(H))
    params = {
        "emb": emb,
        # stored transposed for direct (B, E) @ (E, 3H) / (B, H) @ (H, 3H) matmuls
        "wih_t": (jax.random.normal(k_wih, (3 * H, E), jnp.float32) * scale).T,
        "whh_t": (jax.random.normal(k_whh, (3 * H, H), jnp.float32) * scale).T,
        "bih": (jax.random.normal(k_bih, (3 * H,), jnp.float32) * scale)[None, :],
        "bhh": (jax.random.normal(k_bhh, (3 * H,), jnp.float32) * scale)[None, :],
        "wlin_t": (jax.random.normal(k_wl, (O, H), jnp.float32) * scale).T,
        "blin": (jax.random.normal(k_bl, (O,), jnp.float32) * scale)[None, :],
    }

    # token ids; lengths sorted decreasing (pack_padded_sequence requirement)
    lengths = jnp.array([8, 6, 4, 2], dtype=jnp.int32)
    X = jax.random.randint(k_x, (T, B), 2, TAM_VOCAB, dtype=jnp.int32)
    pad_mask = jnp.arange(T)[:, None] >= lengths[None, :]
    X = jnp.where(pad_mask, IND_PAD, X)

    out = rnn_forward(X, lengths, params)
    jax.block_until_ready(out)

    ref = rnn_forward_ref(X, lengths, params)
    assert out.shape == (B, O)
    # bf16 MXU operands perturb the recurrence at the ~1e-3 level; tolerance loosened
    assert jnp.allclose(out, ref, atol=2e-2, rtol=2e-2), jnp.max(jnp.abs(out - ref))

    print("KERNEL_OK")
</pallas_src>

<mosaic_0001>
module attributes {stable_mosaic.version = 11 : i64} {
  func.func @gru_pool_kernel(%arg0: i32, %arg1: memref<64x32xbf16, #tpu.memory_space<vmem>>, %arg2: memref<32x384xbf16, #tpu.memory_space<vmem>>, %arg3: memref<1x384xf32, #tpu.memory_space<vmem>>, %arg4: memref<128x384xbf16, #tpu.memory_space<vmem>>, %arg5: memref<1x128xf32, #tpu.memory_space<vmem>>, %arg6: memref<8x128xi32, #tpu.memory_space<vmem>>, %arg7: memref<8x128xf32, #tpu.memory_space<vmem>>, %arg8: memref<64x384xf32, #tpu.memory_space<vmem>>) attributes {dimension_semantics = [#tpu.dimension_semantics<arbitrary>], iteration_bounds = array<i64: 1>, scalar_prefetch = 0 : i64, scratch_operands = 1 : i64, tpu.core_type = #tpu.core_type<tc>, window_params = [{pipeline_mode = #tpu.pipeline_mode<synchronous>, transform_indices = @transform_0, window_bounds = array<i64: 64, 32>}, {pipeline_mode = #tpu.pipeline_mode<synchronous>, transform_indices = @transform_1, window_bounds = array<i64: 32, 384>}, {pipeline_mode = #tpu.pipeline_mode<synchronous>, transform_indices = @transform_2, window_bounds = array<i64: 1, 384>}, {pipeline_mode = #tpu.pipeline_mode<synchronous>, transform_indices = @transform_3, window_bounds = array<i64: 128, 384>}, {pipeline_mode = #tpu.pipeline_mode<synchronous>, transform_indices = @transform_4, window_bounds = array<i64: 1, 128>}, {pipeline_mode = #tpu.pipeline_mode<synchronous>, transform_indices = @transform_5, window_bounds = array<i64: 8, 128>}, {pipeline_mode = #tpu.pipeline_mode<synchronous>, transform_indices = @transform_6, window_bounds = array<i64: 8, 128>}]} {
    %c0 = arith.constant 0 : index
    %c0_0 = arith.constant 0 : index
    %0 = vector.load %arg1[%c0, %c0_0] : memref<64x32xbf16, #tpu.memory_space<vmem>>, vector<64x32xbf16>
    %c0_1 = arith.constant 0 : index
    %c0_2 = arith.constant 0 : index
    %1 = vector.load %arg2[%c0_1, %c0_2] : memref<32x384xbf16, #tpu.memory_space<vmem>>, vector<32x384xbf16>
    %cst = arith.constant dense<0.000000e+00> : vector<64x384xf32>
    %2 = tpu.matmul %0, %1, %cst {dimension_numbers = #tpu.dot_dimension_numbers<[1], [0], [0], [1], [0, 0, 1, 1], [], []>} : vector<64x32xbf16>, vector<32x384xbf16>, vector<64x384xf32> -> vector<64x384xf32>
    %c0_3 = arith.constant 0 : index
    %c0_4 = arith.constant 0 : index
    %3 = vector.load %arg3[%c0_3, %c0_4] : memref<1x384xf32, #tpu.memory_space<vmem>>, vector<1x384xf32>
    %4 = vector.broadcast %3 : vector<1x384xf32> to vector<64x384xf32>
    %5 = arith.addf %2, %4 : vector<64x384xf32>
    %c0_5 = arith.constant 0 : index
    %c0_6 = arith.constant 0 : index
    %6 = vector.load %arg8[%c0_5, %c0_6] : memref<64x384xf32, #tpu.memory_space<vmem>>, vector<64x384xf32>
    tpu.vector_store %arg8[%c0_5, %c0_6], %5 {strides = array<i32>} : memref<64x384xf32, #tpu.memory_space<vmem>>, vector<64x384xf32>,
    %c0_7 = arith.constant 0 : index
    %c0_8 = arith.constant 0 : index
    %7 = vector.load %arg4[%c0_7, %c0_8] : memref<128x384xbf16, #tpu.memory_space<vmem>>, vector<128x384xbf16>
    %c0_9 = arith.constant 0 : index
    %c0_10 = arith.constant 0 : index
    %8 = vector.load %arg5[%c0_9, %c0_10] : memref<1x128xf32, #tpu.memory_space<vmem>>, vector<1x128xf32>
    %c0_11 = arith.constant 0 : index
    %c0_12 = arith.constant 0 : index
    %9 = vector.load %arg6[%c0_11, %c0_12] : memref<8x128xi32, #tpu.memory_space<vmem>>, vector<8x128xi32>
    %cst_13 = arith.constant 0.000000e+00 : f32
    %10 = vector.broadcast %cst_13 : f32 to vector<8x128xf32>
    %cst_14 = arith.constant 0xFF800000 : f32
    %11 = vector.broadcast %cst_14 : f32 to vector<8x128xf32>
    %c0_i32 = arith.constant 0 : i32
    %c8_i32 = arith.constant 8 : i32
    %12 = arith.muli %c0_i32, %c8_i32 : i32
    %13 = tpu.assume_multiple %12, 8 : i32
    %14 = arith.index_cast %13 : i32 to index
    %c0_15 = arith.constant 0 : index
    %15 = vector.load %arg8[%14, %c0_15] : memref<64x384xf32, #tpu.memory_space<vmem>>, vector<8x384xf32>
    %16 = arith.truncf %10 : vector<8x128xf32> to vector<8x128xbf16>
    %cst_16 = arith.constant dense<0.000000e+00> : vector<8x384xf32>
    %17 = tpu.matmul %16, %7, %cst_16 {dimension_numbers = #tpu.dot_dimension_numbers<[1], [0], [0], [1], [0, 0, 1, 1], [], []>} : vector<8x128xbf16>, vector<128x384xbf16>, vector<8x384xf32> -> vector<8x384xf32>
    %18 = vector.extract_strided_slice %15 {offsets = [0, 0], sizes = [8, 128], strides = [1, 1]} : vector<8x384xf32> to vector<8x128xf32>
    %19 = vector.extract_strided_slice %17 {offsets = [0, 0], sizes = [8, 128], strides = [1, 1]} : vector<8x384xf32> to vector<8x128xf32>
    %20 = arith.addf %18, %19 : vector<8x128xf32>
    %21 = arith.negf %20 : vector<8x128xf32>
    %22 = math.exp %21 : vector<8x128xf32>
    %cst_17 = arith.constant 1.000000e+00 : f32
    %23 = vector.broadcast %cst_17 : f32 to vector<8x128xf32>
    %24 = arith.addf %23, %22 : vector<8x128xf32>
    %25 = arith.divf %23, %24 : vector<8x128xf32>
    %26 = vector.extract_strided_slice %15 {offsets = [0, 128], sizes = [8, 128], strides = [1, 1]} : vector<8x384xf32> to vector<8x128xf32>
    %27 = vector.extract_strided_slice %17 {offsets = [0, 128], sizes = [8, 128], strides = [1, 1]} : vector<8x384xf32> to vector<8x128xf32>
    %28 = arith.addf %26, %27 : vector<8x128xf32>
    %29 = arith.negf %28 : vector<8x128xf32>
    %30 = math.exp %29 : vector<8x128xf32>
    %cst_18 = arith.constant 1.000000e+00 : f32
    %31 = vector.broadcast %cst_18 : f32 to vector<8x128xf32>
    %32 = arith.addf %31, %30 : vector<8x128xf32>
    %33 = arith.divf %31, %32 : vector<8x128xf32>
    %34 = vector.extract_strided_slice %15 {offsets = [0, 256], sizes = [8, 128], strides = [1, 1]} : vector<8x384xf32> to vector<8x128xf32>
    %35 = vector.extract_strided_slice %17 {offsets = [0, 256], sizes = [8, 128], strides = [1, 1]} : vector<8x384xf32> to vector<8x128xf32>
    %36 = vector.broadcast %8 : vector<1x128xf32> to vector<8x128xf32>
    %37 = arith.addf %35, %36 : vector<8x128xf32>
    %38 = arith.mulf %25, %37 : vector<8x128xf32>
    %39 = arith.addf %34, %38 : vector<8x128xf32>
    %40 = math.tanh %39 : vector<8x128xf32>
    %cst_19 = arith.constant 1.000000e+00 : f32
    %41 = vector.broadcast %cst_19 : f32 to vector<8x128xf32>
    %42 = arith.subf %41, %33 : vector<8x128xf32>
    %43 = arith.mulf %42, %40 : vector<8x128xf32>
    %44 = arith.mulf %33, %10 : vector<8x128xf32>
    %45 = arith.addf %43, %44 : vector<8x128xf32>
    %46 = vector.broadcast %c0_i32 : i32 to vector<8x128xi32>
    %47 = arith.cmpi sgt, %9, %46 : vector<8x128xi32>
    %48 = arith.select %47, %45, %10 : vector<8x128xi1>, vector<8x128xf32>
    %cst_20 = arith.constant 0.000000e+00 : f32
    %49 = vector.broadcast %cst_20 : f32 to vector<8x128xf32>
    %50 = arith.select %47, %45, %49 : vector<8x128xi1>, vector<8x128xf32>
    %51 = arith.maximumf %11, %50 : vector<8x128xf32>
    %c1_i32 = arith.constant 1 : i32
    %c8_i32_21 = arith.constant 8 : i32
    %52 = arith.muli %c1_i32, %c8_i32_21 : i32
    %53 = tpu.assume_multiple %52, 8 : i32
    %54 = arith.index_cast %53 : i32 to index
    %c0_22 = arith.constant 0 : index
    %55 = vector.load %arg8[%54, %c0_22] : memref<64x384xf32, #tpu.memory_space<vmem>>, vector<8x384xf32>
    %56 = arith.truncf %48 : vector<8x128xf32> to vector<8x128xbf16>
    %cst_23 = arith.constant dense<0.000000e+00> : vector<8x384xf32>
    %57 = tpu.matmul %56, %7, %cst_23 {dimension_numbers = #tpu.dot_dimension_numbers<[1], [0], [0], [1], [0, 0, 1, 1], [], []>} : vector<8x128xbf16>, vector<128x384xbf16>, vector<8x384xf32> -> vector<8x384xf32>
    %58 = vector.extract_strided_slice %55 {offsets = [0, 0], sizes = [8, 128], strides = [1, 1]} : vector<8x384xf32> to vector<8x128xf32>
    %59 = vector.extract_strided_slice %57 {offsets = [0, 0], sizes = [8, 128], strides = [1, 1]} : vector<8x384xf32> to vector<8x128xf32>
    %60 = arith.addf %58, %59 : vector<8x128xf32>
    %61 = arith.negf %60 : vector<8x128xf32>
    %62 = math.exp %61 : vector<8x128xf32>
    %cst_24 = arith.constant 1.000000e+00 : f32
    %63 = vector.broadcast %cst_24 : f32 to vector<8x128xf32>
    %64 = arith.addf %63, %62 : vector<8x128xf32>
    %65 = arith.divf %63, %64 : vector<8x128xf32>
    %66 = vector.extract_strided_slice %55 {offsets = [0, 128], sizes = [8, 128], strides = [1, 1]} : vector<8x384xf32> to vector<8x128xf32>
    %67 = vector.extract_strided_slice %57 {offsets = [0, 128], sizes = [8, 128], strides = [1, 1]} : vector<8x384xf32> to vector<8x128xf32>
    %68 = arith.addf %66, %67 : vector<8x128xf32>
    %69 = arith.negf %68 : vector<8x128xf32>
    %70 = math.exp %69 : vector<8x128xf32>
    %cst_25 = arith.constant 1.000000e+00 : f32
    %71 = vector.broadcast %cst_25 : f32 to vector<8x128xf32>
    %72 = arith.addf %71, %70 : vector<8x128xf32>
    %73 = arith.divf %71, %72 : vector<8x128xf32>
    %74 = vector.extract_strided_slice %55 {offsets = [0, 256], sizes = [8, 128], strides = [1, 1]} : vector<8x384xf32> to vector<8x128xf32>
    %75 = vector.extract_strided_slice %57 {offsets = [0, 256], sizes = [8, 128], strides = [1, 1]} : vector<8x384xf32> to vector<8x128xf32>
    %76 = vector.broadcast %8 : vector<1x128xf32> to vector<8x128xf32>
    %77 = arith.addf %75, %76 : vector<8x128xf32>
    %78 = arith.mulf %65, %77 : vector<8x128xf32>
    %79 = arith.addf %74, %78 : vector<8x128xf32>
    %80 = math.tanh %79 : vector<8x128xf32>
    %cst_26 = arith.constant 1.000000e+00 : f32
    %81 = vector.broadcast %cst_26 : f32 to vector<8x128xf32>
    %82 = arith.subf %81, %73 : vector<8x128xf32>
    %83 = arith.mulf %82, %80 : vector<8x128xf32>
    %84 = arith.mulf %73, %48 : vector<8x128xf32>
    %85 = arith.addf %83, %84 : vector<8x128xf32>
    %86 = vector.broadcast %c1_i32 : i32 to vector<8x128xi32>
    %87 = arith.cmpi sgt, %9, %86 : vector<8x128xi32>
    %88 = arith.select %87, %85, %48 : vector<8x128xi1>, vector<8x128xf32>
    %cst_27 = arith.constant 0.000000e+00 : f32
    %89 = vector.broadcast %cst_27 : f32 to vector<8x128xf32>
    %90 = arith.select %87, %85, %89 : vector<8x128xi1>, vector<8x128xf32>
    %91 = arith.maximumf %51, %90 : vector<8x128xf32>
    %c2_i32 = arith.constant 2 : i32
    %c8_i32_28 = arith.constant 8 : i32
    %92 = arith.muli %c2_i32, %c8_i32_28 : i32
    %93 = tpu.assume_multiple %92, 8 : i32
    %94 = arith.index_cast %93 : i32 to index
    %c0_29 = arith.constant 0 : index
    %95 = vector.load %arg8[%94, %c0_29] : memref<64x384xf32, #tpu.memory_space<vmem>>, vector<8x384xf32>
    %96 = arith.truncf %88 : vector<8x128xf32> to vector<8x128xbf16>
    %cst_30 = arith.constant dense<0.000000e+00> : vector<8x384xf32>
    %97 = tpu.matmul %96, %7, %cst_30 {dimension_numbers = #tpu.dot_dimension_numbers<[1], [0], [0], [1], [0, 0, 1, 1], [], []>} : vector<8x128xbf16>, vector<128x384xbf16>, vector<8x384xf32> -> vector<8x384xf32>
    %98 = vector.extract_strided_slice %95 {offsets = [0, 0], sizes = [8, 128], strides = [1, 1]} : vector<8x384xf32> to vector<8x128xf32>
    %99 = vector.extract_strided_slice %97 {offsets = [0, 0], sizes = [8, 128], strides = [1, 1]} : vector<8x384xf32> to vector<8x128xf32>
    %100 = arith.addf %98, %99 : vector<8x128xf32>
    %101 = arith.negf %100 : vector<8x128xf32>
    %102 = math.exp %101 : vector<8x128xf32>
    %cst_31 = arith.constant 1.000000e+00 : f32
    %103 = vector.broadcast %cst_31 : f32 to vector<8x128xf32>
    %104 = arith.addf %103, %102 : vector<8x128xf32>
    %105 = arith.divf %103, %104 : vector<8x128xf32>
    %106 = vector.extract_strided_slice %95 {offsets = [0, 128], sizes = [8, 128], strides = [1, 1]} : vector<8x384xf32> to vector<8x128xf32>
    %107 = vector.extract_strided_slice %97 {offsets = [0, 128], sizes = [8, 128], strides = [1, 1]} : vector<8x384xf32> to vector<8x128xf32>
    %108 = arith.addf %106, %107 : vector<8x128xf32>
    %109 = arith.negf %108 : vector<8x128xf32>
    %110 = math.exp %109 : vector<8x128xf32>
    %cst_32 = arith.constant 1.000000e+00 : f32
    %111 = vector.broadcast %cst_32 : f32 to vector<8x128xf32>
    %112 = arith.addf %111, %110 : vector<8x128xf32>
    %113 = arith.divf %111, %112 : vector<8x128xf32>
    %114 = vector.extract_strided_slice %95 {offsets = [0, 256], sizes = [8, 128], strides = [1, 1]} : vector<8x384xf32> to vector<8x128xf32>
    %115 = vector.extract_strided_slice %97 {offsets = [0, 256], sizes = [8, 128], strides = [1, 1]} : vector<8x384xf32> to vector<8x128xf32>
    %116 = vector.broadcast %8 : vector<1x128xf32> to vector<8x128xf32>
    %117 = arith.addf %115, %116 : vector<8x128xf32>
    %118 = arith.mulf %105, %117 : vector<8x128xf32>
    %119 = arith.addf %114, %118 : vector<8x128xf32>
    %120 = math.tanh %119 : vector<8x128xf32>
    %cst_33 = arith.constant 1.000000e+00 : f32
    %121 = vector.broadcast %cst_33 : f32 to vector<8x128xf32>
    %122 = arith.subf %121, %113 : vector<8x128xf32>
    %123 = arith.mulf %122, %120 : vector<8x128xf32>
    %124 = arith.mulf %113, %88 : vector<8x128xf32>
    %125 = arith.addf %123, %124 : vector<8x128xf32>
    %126 = vector.broadcast %c2_i32 : i32 to vector<8x128xi32>
    %127 = arith.cmpi sgt, %9, %126 : vector<8x128xi32>
    %128 = arith.select %127, %125, %88 : vector<8x128xi1>, vector<8x128xf32>
    %cst_34 = arith.constant 0.000000e+00 : f32
    %129 = vector.broadcast %cst_34 : f32 to vector<8x128xf32>
    %130 = arith.select %127, %125, %129 : vector<8x128xi1>, vector<8x128xf32>
    %131 = arith.maximumf %91, %130 : vector<8x128xf32>
    %c3_i32 = arith.constant 3 : i32
    %c8_i32_35 = arith.constant 8 : i32
    %132 = arith.muli %c3_i32, %c8_i32_35 : i32
    %133 = tpu.assume_multiple %132, 8 : i32
    %134 = arith.index_cast %133 : i32 to index
    %c0_36 = arith.constant 0 : index
    %135 = vector.load %arg8[%134, %c0_36] : memref<64x384xf32, #tpu.memory_space<vmem>>, vector<8x384xf32>
    %136 = arith.truncf %128 : vector<8x128xf32> to vector<8x128xbf16>
    %cst_37 = arith.constant dense<0.000000e+00> : vector<8x384xf32>
    %137 = tpu.matmul %136, %7, %cst_37 {dimension_numbers = #tpu.dot_dimension_numbers<[1], [0], [0], [1], [0, 0, 1, 1], [], []>} : vector<8x128xbf16>, vector<128x384xbf16>, vector<8x384xf32> -> vector<8x384xf32>
    %138 = vector.extract_strided_slice %135 {offsets = [0, 0], sizes = [8, 128], strides = [1, 1]} : vector<8x384xf32> to vector<8x128xf32>
    %139 = vector.extract_strided_slice %137 {offsets = [0, 0], sizes = [8, 128], strides = [1, 1]} : vector<8x384xf32> to vector<8x128xf32>
    %140 = arith.addf %138, %139 : vector<8x128xf32>
    %141 = arith.negf %140 : vector<8x128xf32>
    %142 = math.exp %141 : vector<8x128xf32>
    %cst_38 = arith.constant 1.000000e+00 : f32
    %143 = vector.broadcast %cst_38 : f32 to vector<8x128xf32>
    %144 = arith.addf %143, %142 : vector<8x128xf32>
    %145 = arith.divf %143, %144 : vector<8x128xf32>
    %146 = vector.extract_strided_slice %135 {offsets = [0, 128], sizes = [8, 128], strides = [1, 1]} : vector<8x384xf32> to vector<8x128xf32>
    %147 = vector.extract_strided_slice %137 {offsets = [0, 128], sizes = [8, 128], strides = [1, 1]} : vector<8x384xf32> to vector<8x128xf32>
    %148 = arith.addf %146, %147 : vector<8x128xf32>
    %149 = arith.negf %148 : vector<8x128xf32>
    %150 = math.exp %149 : vector<8x128xf32>
    %cst_39 = arith.constant 1.000000e+00 : f32
    %151 = vector.broadcast %cst_39 : f32 to vector<8x128xf32>
    %152 = arith.addf %151, %150 : vector<8x128xf32>
    %153 = arith.divf %151, %152 : vector<8x128xf32>
    %154 = vector.extract_strided_slice %135 {offsets = [0, 256], sizes = [8, 128], strides = [1, 1]} : vector<8x384xf32> to vector<8x128xf32>
    %155 = vector.extract_strided_slice %137 {offsets = [0, 256], sizes = [8, 128], strides = [1, 1]} : vector<8x384xf32> to vector<8x128xf32>
    %156 = vector.broadcast %8 : vector<1x128xf32> to vector<8x128xf32>
    %157 = arith.addf %155, %156 : vector<8x128xf32>
    %158 = arith.mulf %145, %157 : vector<8x128xf32>
    %159 = arith.addf %154, %158 : vector<8x128xf32>
    %160 = math.tanh %159 : vector<8x128xf32>
    %cst_40 = arith.constant 1.000000e+00 : f32
    %161 = vector.broadcast %cst_40 : f32 to vector<8x128xf32>
    %162 = arith.subf %161, %153 : vector<8x128xf32>
    %163 = arith.mulf %162, %160 : vector<8x128xf32>
    %164 = arith.mulf %153, %128 : vector<8x128xf32>
    %165 = arith.addf %163, %164 : vector<8x128xf32>
    %166 = vector.broadcast %c3_i32 : i32 to vector<8x128xi32>
    %167 = arith.cmpi sgt, %9, %166 : vector<8x128xi32>
    %168 = arith.select %167, %165, %128 : vector<8x128xi1>, vector<8x128xf32>
    %cst_41 = arith.constant 0.000000e+00 : f32
    %169 = vector.broadcast %cst_41 : f32 to vector<8x128xf32>
    %170 = arith.select %167, %165, %169 : vector<8x128xi1>, vector<8x128xf32>
    %171 = arith.maximumf %131, %170 : vector<8x128xf32>
    %c4_i32 = arith.constant 4 : i32
    %c8_i32_42 = arith.constant 8 : i32
    %172 = arith.muli %c4_i32, %c8_i32_42 : i32
    %173 = tpu.assume_multiple %172, 8 : i32
    %174 = arith.index_cast %173 : i32 to index
    %c0_43 = arith.constant 0 : index
    %175 = vector.load %arg8[%174, %c0_43] : memref<64x384xf32, #tpu.memory_space<vmem>>, vector<8x384xf32>
    %176 = arith.truncf %168 : vector<8x128xf32> to vector<8x128xbf16>
    %cst_44 = arith.constant dense<0.000000e+00> : vector<8x384xf32>
    %177 = tpu.matmul %176, %7, %cst_44 {dimension_numbers = #tpu.dot_dimension_numbers<[1], [0], [0], [1], [0, 0, 1, 1], [], []>} : vector<8x128xbf16>, vector<128x384xbf16>, vector<8x384xf32> -> vector<8x384xf32>
    %178 = vector.extract_strided_slice %175 {offsets = [0, 0], sizes = [8, 128], strides = [1, 1]} : vector<8x384xf32> to vector<8x128xf32>
    %179 = vector.extract_strided_slice %177 {offsets = [0, 0], sizes = [8, 128], strides = [1, 1]} : vector<8x384xf32> to vector<8x128xf32>
    %180 = arith.addf %178, %179 : vector<8x128xf32>
    %181 = arith.negf %180 : vector<8x128xf32>
    %182 = math.exp %181 : vector<8x128xf32>
    %cst_45 = arith.constant 1.000000e+00 : f32
    %183 = vector.broadcast %cst_45 : f32 to vector<8x128xf32>
    %184 = arith.addf %183, %182 : vector<8x128xf32>
    %185 = arith.divf %183, %184 : vector<8x128xf32>
    %186 = vector.extract_strided_slice %175 {offsets = [0, 128], sizes = [8, 128], strides = [1, 1]} : vector<8x384xf32> to vector<8x128xf32>
    %187 = vector.extract_strided_slice %177 {offsets = [0, 128], sizes = [8, 128], strides = [1, 1]} : vector<8x384xf32> to vector<8x128xf32>
    %188 = arith.addf %186, %187 : vector<8x128xf32>
    %189 = arith.negf %188 : vector<8x128xf32>
    %190 = math.exp %189 : vector<8x128xf32>
    %cst_46 = arith.constant 1.000000e+00 : f32
    %191 = vector.broadcast %cst_46 : f32 to vector<8x128xf32>
    %192 = arith.addf %191, %190 : vector<8x128xf32>
    %193 = arith.divf %191, %192 : vector<8x128xf32>
    %194 = vector.extract_strided_slice %175 {offsets = [0, 256], sizes = [8, 128], strides = [1, 1]} : vector<8x384xf32> to vector<8x128xf32>
    %195 = vector.extract_strided_slice %177 {offsets = [0, 256], sizes = [8, 128], strides = [1, 1]} : vector<8x384xf32> to vector<8x128xf32>
    %196 = vector.broadcast %8 : vector<1x128xf32> to vector<8x128xf32>
    %197 = arith.addf %195, %196 : vector<8x128xf32>
    %198 = arith.mulf %185, %197 : vector<8x128xf32>
    %199 = arith.addf %194, %198 : vector<8x128xf32>
    %200 = math.tanh %199 : vector<8x128xf32>
    %cst_47 = arith.constant 1.000000e+00 : f32
    %201 = vector.broadcast %cst_47 : f32 to vector<8x128xf32>
    %202 = arith.subf %201, %193 : vector<8x128xf32>
    %203 = arith.mulf %202, %200 : vector<8x128xf32>
    %204 = arith.mulf %193, %168 : vector<8x128xf32>
    %205 = arith.addf %203, %204 : vector<8x128xf32>
    %206 = vector.broadcast %c4_i32 : i32 to vector<8x128xi32>
    %207 = arith.cmpi sgt, %9, %206 : vector<8x128xi32>
    %208 = arith.select %207, %205, %168 : vector<8x128xi1>, vector<8x128xf32>
    %cst_48 = arith.constant 0.000000e+00 : f32
    %209 = vector.broadcast %cst_48 : f32 to vector<8x128xf32>
    %210 = arith.select %207, %205, %209 : vector<8x128xi1>, vector<8x128xf32>
    %211 = arith.maximumf %171, %210 : vector<8x128xf32>
    %c5_i32 = arith.constant 5 : i32
    %c8_i32_49 = arith.constant 8 : i32
    %212 = arith.muli %c5_i32, %c8_i32_49 : i32
    %213 = tpu.assume_multiple %212, 8 : i32
    %214 = arith.index_cast %213 : i32 to index
    %c0_50 = arith.constant 0 : index
    %215 = vector.load %arg8[%214, %c0_50] : memref<64x384xf32, #tpu.memory_space<vmem>>, vector<8x384xf32>
    %216 = arith.truncf %208 : vector<8x128xf32> to vector<8x128xbf16>
    %cst_51 = arith.constant dense<0.000000e+00> : vector<8x384xf32>
    %217 = tpu.matmul %216, %7, %cst_51 {dimension_numbers = #tpu.dot_dimension_numbers<[1], [0], [0], [1], [0, 0, 1, 1], [], []>} : vector<8x128xbf16>, vector<128x384xbf16>, vector<8x384xf32> -> vector<8x384xf32>
    %218 = vector.extract_strided_slice %215 {offsets = [0, 0], sizes = [8, 128], strides = [1, 1]} : vector<8x384xf32> to vector<8x128xf32>
    %219 = vector.extract_strided_slice %217 {offsets = [0, 0], sizes = [8, 128], strides = [1, 1]} : vector<8x384xf32> to vector<8x128xf32>
    %220 = arith.addf %218, %219 : vector<8x128xf32>
    %221 = arith.negf %220 : vector<8x128xf32>
    %222 = math.exp %221 : vector<8x128xf32>
    %cst_52 = arith.constant 1.000000e+00 : f32
    %223 = vector.broadcast %cst_52 : f32 to vector<8x128xf32>
    %224 = arith.addf %223, %222 : vector<8x128xf32>
    %225 = arith.divf %223, %224 : vector<8x128xf32>
    %226 = vector.extract_strided_slice %215 {offsets = [0, 128], sizes = [8, 128], strides = [1, 1]} : vector<8x384xf32> to vector<8x128xf32>
    %227 = vector.extract_strided_slice %217 {offsets = [0, 128], sizes = [8, 128], strides = [1, 1]} : vector<8x384xf32> to vector<8x128xf32>
    %228 = arith.addf %226, %227 : vector<8x128xf32>
    %229 = arith.negf %228 : vector<8x128xf32>
    %230 = math.exp %229 : vector<8x128xf32>
    %cst_53 = arith.constant 1.000000e+00 : f32
    %231 = vector.broadcast %cst_53 : f32 to vector<8x128xf32>
    %232 = arith.addf %231, %230 : vector<8x128xf32>
    %233 = arith.divf %231, %232 : vector<8x128xf32>
    %234 = vector.extract_strided_slice %215 {offsets = [0, 256], sizes = [8, 128], strides = [1, 1]} : vector<8x384xf32> to vector<8x128xf32>
    %235 = vector.extract_strided_slice %217 {offsets = [0, 256], sizes = [8, 128], strides = [1, 1]} : vector<8x384xf32> to vector<8x128xf32>
    %236 = vector.broadcast %8 : vector<1x128xf32> to vector<8x128xf32>
    %237 = arith.addf %235, %236 : vector<8x128xf32>
    %238 = arith.mulf %225, %237 : vector<8x128xf32>
    %239 = arith.addf %234, %238 : vector<8x128xf32>
    %240 = math.tanh %239 : vector<8x128xf32>
    %cst_54 = arith.constant 1.000000e+00 : f32
    %241 = vector.broadcast %cst_54 : f32 to vector<8x128xf32>
    %242 = arith.subf %241, %233 : vector<8x128xf32>
    %243 = arith.mulf %242, %240 : vector<8x128xf32>
    %244 = arith.mulf %233, %208 : vector<8x128xf32>
    %245 = arith.addf %243, %244 : vector<8x128xf32>
    %246 = vector.broadcast %c5_i32 : i32 to vector<8x128xi32>
    %247 = arith.cmpi sgt, %9, %246 : vector<8x128xi32>
    %248 = arith.select %247, %245, %208 : vector<8x128xi1>, vector<8x128xf32>
    %cst_55 = arith.constant 0.000000e+00 : f32
    %249 = vector.broadcast %cst_55 : f32 to vector<8x128xf32>
    %250 = arith.select %247, %245, %249 : vector<8x128xi1>, vector<8x128xf32>
    %251 = arith.maximumf %211, %250 : vector<8x128xf32>
    %c6_i32 = arith.constant 6 : i32
    %c8_i32_56 = arith.constant 8 : i32
    %252 = arith.muli %c6_i32, %c8_i32_56 : i32
    %253 = tpu.assume_multiple %252, 8 : i32
    %254 = arith.index_cast %253 : i32 to index
    %c0_57 = arith.constant 0 : index
    %255 = vector.load %arg8[%254, %c0_57] : memref<64x384xf32, #tpu.memory_space<vmem>>, vector<8x384xf32>
    %256 = arith.truncf %248 : vector<8x128xf32> to vector<8x128xbf16>
    %cst_58 = arith.constant dense<0.000000e+00> : vector<8x384xf32>
    %257 = tpu.matmul %256, %7, %cst_58 {dimension_numbers = #tpu.dot_dimension_numbers<[1], [0], [0], [1], [0, 0, 1, 1], [], []>} : vector<8x128xbf16>, vector<128x384xbf16>, vector<8x384xf32> -> vector<8x384xf32>
    %258 = vector.extract_strided_slice %255 {offsets = [0, 0], sizes = [8, 128], strides = [1, 1]} : vector<8x384xf32> to vector<8x128xf32>
    %259 = vector.extract_strided_slice %257 {offsets = [0, 0], sizes = [8, 128], strides = [1, 1]} : vector<8x384xf32> to vector<8x128xf32>
    %260 = arith.addf %258, %259 : vector<8x128xf32>
    %261 = arith.negf %260 : vector<8x128xf32>
    %262 = math.exp %261 : vector<8x128xf32>
    %cst_59 = arith.constant 1.000000e+00 : f32
    %263 = vector.broadcast %cst_59 : f32 to vector<8x128xf32>
    %264 = arith.addf %263, %262 : vector<8x128xf32>
    %265 = arith.divf %263, %264 : vector<8x128xf32>
    %266 = vector.extract_strided_slice %255 {offsets = [0, 128], sizes = [8, 128], strides = [1, 1]} : vector<8x384xf32> to vector<8x128xf32>
    %267 = vector.extract_strided_slice %257 {offsets = [0, 128], sizes = [8, 128], strides = [1, 1]} : vector<8x384xf32> to vector<8x128xf32>
    %268 = arith.addf %266, %267 : vector<8x128xf32>
    %269 = arith.negf %268 : vector<8x128xf32>
    %270 = math.exp %269 : vector<8x128xf32>
    %cst_60 = arith.constant 1.000000e+00 : f32
    %271 = vector.broadcast %cst_60 : f32 to vector<8x128xf32>
    %272 = arith.addf %271, %270 : vector<8x128xf32>
    %273 = arith.divf %271, %272 : vector<8x128xf32>
    %274 = vector.extract_strided_slice %255 {offsets = [0, 256], sizes = [8, 128], strides = [1, 1]} : vector<8x384xf32> to vector<8x128xf32>
    %275 = vector.extract_strided_slice %257 {offsets = [0, 256], sizes = [8, 128], strides = [1, 1]} : vector<8x384xf32> to vector<8x128xf32>
    %276 = vector.broadcast %8 : vector<1x128xf32> to vector<8x128xf32>
    %277 = arith.addf %275, %276 : vector<8x128xf32>
    %278 = arith.mulf %265, %277 : vector<8x128xf32>
    %279 = arith.addf %274, %278 : vector<8x128xf32>
    %280 = math.tanh %279 : vector<8x128xf32>
    %cst_61 = arith.constant 1.000000e+00 : f32
    %281 = vector.broadcast %cst_61 : f32 to vector<8x128xf32>
    %282 = arith.subf %281, %273 : vector<8x128xf32>
    %283 = arith.mulf %282, %280 : vector<8x128xf32>
    %284 = arith.mulf %273, %248 : vector<8x128xf32>
    %285 = arith.addf %283, %284 : vector<8x128xf32>
    %286 = vector.broadcast %c6_i32 : i32 to vector<8x128xi32>
    %287 = arith.cmpi sgt, %9, %286 : vector<8x128xi32>
    %288 = arith.select %287, %285, %248 : vector<8x128xi1>, vector<8x128xf32>
    %cst_62 = arith.constant 0.000000e+00 : f32
    %289 = vector.broadcast %cst_62 : f32 to vector<8x128xf32>
    %290 = arith.select %287, %285, %289 : vector<8x128xi1>, vector<8x128xf32>
    %291 = arith.maximumf %251, %290 : vector<8x128xf32>
    %c7_i32 = arith.constant 7 : i32
    %c8_i32_63 = arith.constant 8 : i32
    %292 = arith.muli %c7_i32, %c8_i32_63 : i32
    %293 = tpu.assume_multiple %292, 8 : i32
    %294 = arith.index_cast %293 : i32 to index
    %c0_64 = arith.constant 0 : index
    %295 = vector.load %arg8[%294, %c0_64] : memref<64x384xf32, #tpu.memory_space<vmem>>, vector<8x384xf32>
    %296 = arith.truncf %288 : vector<8x128xf32> to vector<8x128xbf16>
    %cst_65 = arith.constant dense<0.000000e+00> : vector<8x384xf32>
    %297 = tpu.matmul %296, %7, %cst_65 {dimension_numbers = #tpu.dot_dimension_numbers<[1], [0], [0], [1], [0, 0, 1, 1], [], []>} : vector<8x128xbf16>, vector<128x384xbf16>, vector<8x384xf32> -> vector<8x384xf32>
    %298 = vector.extract_strided_slice %295 {offsets = [0, 0], sizes = [8, 128], strides = [1, 1]} : vector<8x384xf32> to vector<8x128xf32>
    %299 = vector.extract_strided_slice %297 {offsets = [0, 0], sizes = [8, 128], strides = [1, 1]} : vector<8x384xf32> to vector<8x128xf32>
    %300 = arith.addf %298, %299 : vector<8x128xf32>
    %301 = arith.negf %300 : vector<8x128xf32>
    %302 = math.exp %301 : vector<8x128xf32>
    %cst_66 = arith.constant 1.000000e+00 : f32
    %303 = vector.broadcast %cst_66 : f32 to vector<8x128xf32>
    %304 = arith.addf %303, %302 : vector<8x128xf32>
    %305 = arith.divf %303, %304 : vector<8x128xf32>
    %306 = vector.extract_strided_slice %295 {offsets = [0, 128], sizes = [8, 128], strides = [1, 1]} : vector<8x384xf32> to vector<8x128xf32>
    %307 = vector.extract_strided_slice %297 {offsets = [0, 128], sizes = [8, 128], strides = [1, 1]} : vector<8x384xf32> to vector<8x128xf32>
    %308 = arith.addf %306, %307 : vector<8x128xf32>
    %309 = arith.negf %308 : vector<8x128xf32>
    %310 = math.exp %309 : vector<8x128xf32>
    %cst_67 = arith.constant 1.000000e+00 : f32
    %311 = vector.broadcast %cst_67 : f32 to vector<8x128xf32>
    %312 = arith.addf %311, %310 : vector<8x128xf32>
    %313 = arith.divf %311, %312 : vector<8x128xf32>
    %314 = vector.extract_strided_slice %295 {offsets = [0, 256], sizes = [8, 128], strides = [1, 1]} : vector<8x384xf32> to vector<8x128xf32>
    %315 = vector.extract_strided_slice %297 {offsets = [0, 256], sizes = [8, 128], strides = [1, 1]} : vector<8x384xf32> to vector<8x128xf32>
    %316 = vector.broadcast %8 : vector<1x128xf32> to vector<8x128xf32>
    %317 = arith.addf %315, %316 : vector<8x128xf32>
    %318 = arith.mulf %305, %317 : vector<8x128xf32>
    %319 = arith.addf %314, %318 : vector<8x128xf32>
    %320 = math.tanh %319 : vector<8x128xf32>
    %cst_68 = arith.constant 1.000000e+00 : f32
    %321 = vector.broadcast %cst_68 : f32 to vector<8x128xf32>
    %322 = arith.subf %321, %313 : vector<8x128xf32>
    %323 = arith.mulf %322, %320 : vector<8x128xf32>
    %324 = arith.mulf %313, %288 : vector<8x128xf32>
    %325 = arith.addf %323, %324 : vector<8x128xf32>
    %326 = vector.broadcast %c7_i32 : i32 to vector<8x128xi32>
    %327 = arith.cmpi sgt, %9, %326 : vector<8x128xi32>
    %328 = arith.select %327, %325, %288 : vector<8x128xi1>, vector<8x128xf32>
    %cst_69 = arith.constant 0.000000e+00 : f32
    %329 = vector.broadcast %cst_69 : f32 to vector<8x128xf32>
    %330 = arith.select %327, %325, %329 : vector<8x128xi1>, vector<8x128xf32>
    %331 = arith.maximumf %291, %330 : vector<8x128xf32>
    %c8_i32_70 = arith.constant 8 : i32
    %c0_71 = arith.constant 0 : index
    %c0_72 = arith.constant 0 : index
    %332 = vector.load %arg7[%c0_71, %c0_72] : memref<8x128xf32, #tpu.memory_space<vmem>>, vector<8x128xf32>
    tpu.vector_store %arg7[%c0_71, %c0_72], %331 {strides = array<i32>} : memref<8x128xf32, #tpu.memory_space<vmem>>, vector<8x128xf32>,
    return
  }
  func.func @transform_0(%arg0: i32) -> (i32, i32) {
    %c0_i32 = arith.constant 0 : i32
    %c0_i32_0 = arith.constant 0 : i32
    %c0_i32_1 = arith.constant 0 : i32
    return %c0_i32, %c0_i32_0 : i32, i32
  }
  func.func @transform_1(%arg0: i32) -> (i32, i32) {
    %c0_i32 = arith.constant 0 : i32
    %c0_i32_0 = arith.constant 0 : i32
    %c0_i32_1 = arith.constant 0 : i32
    return %c0_i32, %c0_i32_0 : i32, i32
  }
  func.func @transform_2(%arg0: i32) -> (i32, i32) {
    %c0_i32 = arith.constant 0 : i32
    %c0_i32_0 = arith.constant 0 : i32
    %c0_i32_1 = arith.constant 0 : i32
    return %c0_i32, %c0_i32_0 : i32, i32
  }
  func.func @transform_3(%arg0: i32) -> (i32, i32) {
    %c0_i32 = arith.constant 0 : i32
    %c0_i32_0 = arith.constant 0 : i32
    %c0_i32_1 = arith.constant 0 : i32
    return %c0_i32, %c0_i32_0 : i32, i32
  }
  func.func @transform_4(%arg0: i32) -> (i32, i32) {
    %c0_i32 = arith.constant 0 : i32
    %c0_i32_0 = arith.constant 0 : i32
    %c0_i32_1 = arith.constant 0 : i32
    return %c0_i32, %c0_i32_0 : i32, i32
  }
  func.func @transform_5(%arg0: i32) -> (i32, i32) {
    %c0_i32 = arith.constant 0 : i32
    %c0_i32_0 = arith.constant 0 : i32
    %c0_i32_1 = arith.constant 0 : i32
    return %c0_i32, %c0_i32_0 : i32, i32
  }
  func.func @transform_6(%arg0: i32) -> (i32, i32) {
    %c0_i32 = arith.constant 0 : i32
    %c0_i32_0 = arith.constant 0 : i32
    %c0_i32_1 = arith.constant 0 : i32
    return %c0_i32, %c0_i32_0 : i32, i32
  }
}

</mosaic_0001>

<llo_original>
// kernel: tpu_custom_call.1
$region0: #{tpu_custom_call.1}
  #allocation0 [shape = 'u32[]', space=smem, size = 0x4, offset = 0x4, fixed_abs, tag = 'smem constant byte address 0x4 - core index']
  #allocation1 [shape = 'u32[144,128]{1,0:T(1,128)}', space=vmem, size = 0x12000, scoped, tag = 'internal scratch']
  #allocation2 [shape = 'f32[64,384]{1,0:T(8,128)}', space=vmem, size = 0x18000, scoped, tag = 'scratch operand']
  %s0 = inlined_call_operand.vmem [shape: bf16[64,32], index: 0, kind: input, shape index: {}]
  %s1 = inlined_call_operand.vmem [shape: bf16[32,384], index: 1, kind: input, shape index: {}]
  %s2 = inlined_call_operand.vmem [shape: f32[1,384], index: 2, kind: input, shape index: {}]
  %s3 = inlined_call_operand.hbm [shape: bf16[128,384], index: 3, kind: input, shape index: {}]
  %s4 = inlined_call_operand.vmem [shape: f32[1,128], index: 4, kind: input, shape index: {}]
  %s5 = inlined_call_operand.vmem [shape: s32[8,128], index: 5, kind: input, shape index: {}]
  %s6 = inlined_call_operand.hbm [shape: f32[8,128], index: 6, kind: output, shape index: {}]
  %s7 = sld [smem:[#allocation0]]
  $region38: #{tpu_custom_call.1} parent=0
    _
  %s9 = ssub.s32 1, %s7
  %s10 = scalar_select 0, %s9, %s7
  $region1: #{tpu_custom_call.1} parent=0
    #allocation3 [shape = 'u8[98304]{0}', space=vmem, size = 0x18000, scoped, tag = 'input window, operand 3, single buffered']
    #allocation4 [shape = 's32[1]{0}', space=sflag, size = 0x4, scoped, tag = 'scoped memory for tpu_custom_call.1']
    #allocation5 [shape = 's32[1]{0}', space=sflag, size = 0x4, scoped, tag = 'scoped memory for tpu_custom_call.1']
    #allocation6 [shape = 'u8[4096]{0}', space=vmem, size = 0x1000, scoped, tag = 'output window, operand 0, single buffered']
    %11 = vsyncpa [#allocation4], 0
    %12 = vsyncpa [#allocation5], 0
    // Predicated region
    $region2: #{tpu_custom_call.1} parent=1 // pred_check
      _
    $region3: #{tpu_custom_call.1} parent=1 // pred_check_branch
      %14 = sbr.rel (0) target = $region5
    $region4: #{tpu_custom_call.1} parent=1 // pred_region
      _
    $region5: #{tpu_custom_call.1} parent=1 // pred_fallthru
      _
    // Predicated region
    $region6: #{tpu_custom_call.1} parent=1 // pred_check
      _
    $region7: #{tpu_custom_call.1} parent=1 // pred_check_branch
      %16 = sbr.rel (0) target = $region9
    $region8: #{tpu_custom_call.1} parent=1 // pred_region
      _
    $region9: #{tpu_custom_call.1} parent=1 // pred_fallthru
      _
    // Predicated region
    $region10: #{tpu_custom_call.1} parent=1 // pred_check
      _
    $region11: #{tpu_custom_call.1} parent=1 // pred_check_branch
      %18 = sbr.rel (0) target = $region13
    $region12: #{tpu_custom_call.1} parent=1 // pred_region
      _
    $region13: #{tpu_custom_call.1} parent=1 // pred_fallthru
      _
    // Predicated region
    $region14: #{tpu_custom_call.1} parent=1 // pred_check
      _
    $region15: #{tpu_custom_call.1} parent=1 // pred_check_branch
      %20 = sbr.rel (0) target = $region17
    $region16: #{tpu_custom_call.1} parent=1 // pred_region
      %s22 = ssub.s32 3072, 3072
      %23 = vsyncadd [#allocation4], %s22
      %s24 = sshll.u32 [#allocation3], 4
      %s25 = int_to_ptr.vmem [resolvable:$true] %s24
      %30 = dma.hbm_to_vmem [thread:$0]  %s3, 3072, %s25, [#allocation4], 192, 192, 12
    $region17: #{tpu_custom_call.1} parent=1 // pred_fallthru
      _
    // Predicated region
    $region18: #{tpu_custom_call.1} parent=1 // pred_check
      _
    $region19: #{tpu_custom_call.1} parent=1 // pred_check_branch
      %32 = sbr.rel (0) target = $region21
    $region20: #{tpu_custom_call.1} parent=1 // pred_region
      _
    $region21: #{tpu_custom_call.1} parent=1 // pred_fallthru
      _
    // Predicated region
    $region22: #{tpu_custom_call.1} parent=1 // pred_check
      _
    $region23: #{tpu_custom_call.1} parent=1 // pred_check_branch
      %34 = sbr.rel (0) target = $region25
    $region24: #{tpu_custom_call.1} parent=1 // pred_region
      _
    $region25: #{tpu_custom_call.1} parent=1 // pred_fallthru
      _
    // Predicated region
    $region26: #{tpu_custom_call.1} parent=1 // pred_check
      _
    $region27: #{tpu_custom_call.1} parent=1 // pred_check_branch
      %36 = sbr.rel (0) target = $region29
    $region28: #{tpu_custom_call.1} parent=1 // pred_region
      %37 = dma.done [#allocation4], 3072
    $region29: #{tpu_custom_call.1} parent=1 // pred_fallthru
      _
    %v39 = vld [vmem:[%s0] sm:$0xf]
    %v40 = vld [vmem:[%s0 + $0x4] sm:$0xf]
    %v41 = vld [vmem:[%s0 + $0x8] sm:$0xf]
    %v42 = vld [vmem:[%s0 + $0xc] sm:$0xf]
    %v43 = vld [vmem:[%s0 + $0x10] sm:$0xf]
    %v44 = vld [vmem:[%s0 + $0x14] sm:$0xf]
    %v45 = vld [vmem:[%s0 + $0x18] sm:$0xf]
    %v46 = vld [vmem:[%s0 + $0x1c] sm:$0xf]
    %v47 = vld [vmem:[%s1] sm:$0xff]
    %v48 = vld [vmem:[%s1 + $0x8] sm:$0xf]
    %v49 = vld [vmem:[%s1 + $0xc] sm:$0xff]
    %v50 = vld [vmem:[%s1 + $0x14] sm:$0xf]
    %v51 = vld [vmem:[%s1 + $0x18] sm:$0xff]
    %v52 = vld [vmem:[%s1 + $0x20] sm:$0xf]
    %v53 = vld [vmem:[%s1 + $0x24] sm:$0xff]
    %v54 = vld [vmem:[%s1 + $0x2c] sm:$0xf]
    %v55 = vld [vmem:[%s2] sm:$0x7]
    %v57 = vlaneseq
    %v58 = vshrl.u32 %v57, 7
    %v59 = vsub.s32 0, %v58
    %v60 = vrot.slane %v55, %v59
    %v61 = vlaneseq
    %v62 = vshrl.u32 %v61, 7
    %v63 = vsub.s32 1, %v62
    %v64 = vrot.slane %v55, %v63
    %v65 = vlaneseq
    %v66 = vshrl.u32 %v65, 7
    %v67 = vsub.s32 2, %v66
    %v68 = vrot.slane %v55, %v67
    %v80 = vunpack.c.l.b16 %v39
    %v81 = vunpack.c.l.b16 %v40
    %v82 = vunpack.c.l.b16 %v41
    %v83 = vunpack.c.l.b16 %v42
    %v84 = vunpack.c.l.b16 %v43
    %v85 = vunpack.c.l.b16 %v44
    %v86 = vunpack.c.l.b16 %v45
    %v87 = vunpack.c.l.b16 %v46
    %v88 = vpack.c.b16 %v81, %v80
    %v89 = vpack.c.b16 %v83, %v82
    %v90 = vpack.c.b16 %v85, %v84
    %v91 = vpack.c.b16 %v87, %v86
    %v100 = vunpack.c.l.b16 %v47
    %v101 = vunpack.c.h.b16 %v47
    %v102 = vunpack.c.l.b16 %v48
    %v103 = vunpack.c.l.b16 %v49
    %v104 = vunpack.c.h.b16 %v49
    %v105 = vunpack.c.l.b16 %v50
    %v106 = vunpack.c.l.b16 %v51
    %v107 = vunpack.c.h.b16 %v51
    %v108 = vunpack.c.l.b16 %v52
    %v109 = vunpack.c.l.b16 %v53
    %v110 = vunpack.c.h.b16 %v53
    %v111 = vunpack.c.l.b16 %v54
    %v112 = vpack.c.b16 %v103, %v100
    %v113 = vpack.c.b16 %v104, %v101
    %v114 = vpack.c.b16 %v105, %v102
    %v115 = vpack.c.b16 %v109, %v106
    %v116 = vpack.c.b16 %v110, %v107
    %v117 = vpack.c.b16 %v111, %v108
    %vm124 = vcmask 261120
    %v126 = vsel %vm124, %v88, 0
    %v129 = vsel %vm124, %v89, 0
    %v132 = vsel %vm124, %v90, 0
    %v135 = vsel %vm124, %v91, 0
    %137 = vmatprep.subr.bf16.mxu0 %v113
    %138 = vmatpush1.bf16.msra.mxu0 %v112
    %139 = vmatprep.subr.bf16.mxu0 %v116
    %140 = vmatpush1.bf16.msra.mxu0 %v115
    %141 = vmatprep.subr.bf16.mxu0 0
    %142 = vmatpush1.bf16.msra.mxu0 0
    %143 = vmatprep.subr.bf16.mxu0 0
    %144 = vmatpush1.bf16.msra.mxu0 0
    %145 = vmatprep.subr.bf16.mxu0 0
    %146 = vmatpush1.bf16.msra.mxu0 0
    %147 = vmatprep.subr.bf16.mxu0 0
    %148 = vmatpush1.bf16.msra.mxu0 0
    %149 = vmatprep.subr.bf16.mxu0 0
    %150 = vmatpush1.bf16.msra.mxu0 0
    %151 = vmatprep.subr.bf16.mxu0 0
    %152 = vmatpush1.bf16.msra.mxu0 0
    %153 = vmatprep.subr.bf16.mxu0 0
    %154 = vmatpush1.bf16.msra.mxu0 0
    %155 = vmatprep.subr.bf16.mxu0 0
    %156 = vmatpush1.bf16.msra.mxu0 0
    %157 = vmatprep.subr.bf16.mxu0 0
    %158 = vmatpush1.bf16.msra.mxu0 0
    %159 = vmatprep.subr.bf16.mxu0 0
    %160 = vmatpush1.bf16.msra.mxu0 0
    %161 = vmatprep.subr.bf16.mxu0 0
    %162 = vmatpush1.bf16.msra.mxu0 0
    %163 = vmatprep.subr.bf16.mxu0 0
    %164 = vmatpush1.bf16.msra.mxu0 0
    %165 = vmatprep.subr.bf16.mxu0 0
    %166 = vmatpush1.bf16.msra.mxu0 0
    %167 = vmatprep.subr.bf16.mxu0 0
    %168 = vmatpush1.bf16.msra.mxu0 0
    %169 = vmatprep.mubr.bf16.mxu0 0
    %170 = vmatmul.mubr.bf16.gmra.mrb[0].mxu0 %v126
    %v171 = vpop.f32.mrb[0].mxu0
    %v172 = vadd.f32 %v60, %v171
    %v173 = vpop.f32.mrb[0].mxu0
    %v174 = vadd.f32 %v64, %v173
    %v175 = vpop.f32.mrb[0].mxu0
    %v176 = vadd.f32 %v60, %v175
    %v177 = vpop.f32.mrb[0].mxu0
    %v178 = vadd.f32 %v64, %v177
    %179 = vmatprep.mubr.bf16.mxu0 0
    %180 = vmatmul.mubr.bf16.gmra.mrb[0].mxu0 %v129
    %v181 = vpop.f32.mrb[0].mxu0
    %v182 = vadd.f32 %v60, %v181
    %v183 = vpop.f32.mrb[0].mxu0
    %v184 = vadd.f32 %v64, %v183
    %v185 = vpop.f32.mrb[0].mxu0
    %v186 = vadd.f32 %v60, %v185
    %v187 = vpop.f32.mrb[0].mxu0
    %v188 = vadd.f32 %v64, %v187
    %189 = vmatprep.mubr.bf16.mxu0 0
    %190 = vmatmul.mubr.bf16.gmra.mrb[0].mxu0 %v132
    %v191 = vpop.f32.mrb[0].mxu0
    %v192 = vadd.f32 %v60, %v191
    %v193 = vpop.f32.mrb[0].mxu0
    %v194 = vadd.f32 %v64, %v193
    %v195 = vpop.f32.mrb[0].mxu0
    %v196 = vadd.f32 %v60, %v195
    %v197 = vpop.f32.mrb[0].mxu0
    %v198 = vadd.f32 %v64, %v197
    %199 = vmatprep.mubr.bf16.mxu0 0
    %200 = vmatmul.mubr.bf16.gmra.mrb[0].mxu0 %v135
    %v201 = vpop.f32.mrb[0].mxu0
    %v202 = vadd.f32 %v60, %v201
    %v203 = vpop.f32.mrb[0].mxu0
    %v204 = vadd.f32 %v64, %v203
    %v205 = vpop.f32.mrb[0].mxu0
    %v206 = vadd.f32 %v60, %v205
    %v207 = vpop.f32.mrb[0].mxu0
    %v208 = vadd.f32 %v64, %v207
    %209 = vdwg.mxu0
    %210 = vmatprep.subr.bf16.mxu0 0
    %211 = vmatpush1.bf16.msra.mxu0 %v114
    %212 = vmatprep.subr.bf16.mxu0 0
    %213 = vmatpush1.bf16.msra.mxu0 %v117
    %214 = vmatprep.subr.bf16.mxu0 0
    %215 = vmatpush1.bf16.msra.mxu0 0
    %216 = vmatprep.subr.bf16.mxu0 0
    %217 = vmatpush1.bf16.msra.mxu0 0
    %218 = vmatprep.subr.bf16.mxu0 0
    %219 = vmatpush1.bf16.msra.mxu0 0
    %220 = vmatprep.subr.bf16.mxu0 0
    %221 = vmatpush1.bf16.msra.mxu0 0
    %222 = vmatprep.subr.bf16.mxu0 0
    %223 = vmatpush1.bf16.msra.mxu0 0
    %224 = vmatprep.subr.bf16.mxu0 0
    %225 = vmatpush1.bf16.msra.mxu0 0
    %226 = vmatprep.subr.bf16.mxu0 0
    %227 = vmatpush1.bf16.msra.mxu0 0
    %228 = vmatprep.subr.bf16.mxu0 0
    %229 = vmatpush1.bf16.msra.mxu0 0
    %230 = vmatprep.subr.bf16.mxu0 0
    %231 = vmatpush1.bf16.msra.mxu0 0
    %232 = vmatprep.subr.bf16.mxu0 0
    %233 = vmatpush1.bf16.msra.mxu0 0
    %234 = vmatprep.subr.bf16.mxu0 0
    %235 = vmatpush1.bf16.msra.mxu0 0
    %236 = vmatprep.subr.bf16.mxu0 0
    %237 = vmatpush1.bf16.msra.mxu0 0
    %238 = vmatprep.subr.bf16.mxu0 0
    %239 = vmatpush1.bf16.msra.mxu0 0
    %240 = vmatprep.subr.bf16.mxu0 0
    %241 = vmatpush1.bf16.msra.mxu0 0
    %242 = vmatprep.mubr.bf16.mxu0 0
    %243 = vmatmul.mubr.bf16.gmra.mrb[0].mxu0 %v126
    %v244 = vpop.f32.mrb[0].mxu0
    %v245 = vadd.f32 %v68, %v244
    %v246 = vpop.f32.mrb[0].mxu0
    %v247 = vpop.f32.mrb[0].mxu0
    %v248 = vadd.f32 %v68, %v247
    %v249 = vpop.f32.mrb[0].mxu0
    %250 = vmatprep.mubr.bf16.mxu0 0
    %251 = vmatmul.mubr.bf16.gmra.mrb[0].mxu0 %v129
    %v252 = vpop.f32.mrb[0].mxu0
    %v253 = vadd.f32 %v68, %v252
    %v254 = vpop.f32.mrb[0].mxu0
    %v255 = vpop.f32.mrb[0].mxu0
    %v256 = vadd.f32 %v68, %v255
    %v257 = vpop.f32.mrb[0].mxu0
    %258 = vmatprep.mubr.bf16.mxu0 0
    %259 = vmatmul.mubr.bf16.gmra.mrb[0].mxu0 %v132
    %v260 = vpop.f32.mrb[0].mxu0
    %v261 = vadd.f32 %v68, %v260
    %v262 = vpop.f32.mrb[0].mxu0
    %v263 = vpop.f32.mrb[0].mxu0
    %v264 = vadd.f32 %v68, %v263
    %v265 = vpop.f32.mrb[0].mxu0
    %266 = vmatprep.mubr.bf16.mxu0 0
    %267 = vmatmul.mubr.bf16.gmra.mrb[0].mxu0 %v135
    %v268 = vpop.f32.mrb[0].mxu0
    %v269 = vadd.f32 %v68, %v268
    %v270 = vpop.f32.mrb[0].mxu0
    %v271 = vpop.f32.mrb[0].mxu0
    %v272 = vadd.f32 %v68, %v271
    %v273 = vpop.f32.mrb[0].mxu0
    %274 = vdwg.mxu0
    %275 = vst [vmem:[#allocation2] sm:$0xff] %v172
    %276 = vst [vmem:[#allocation2 + $0x8] sm:$0xff] %v174
    %277 = vst [vmem:[#allocation2 + $0x10] sm:$0xff] %v245
    %278 = vst [vmem:[#allocation2 + $0x18] sm:$0xff] %v176
    %279 = vst [vmem:[#allocation2 + $0x20] sm:$0xff] %v178
    %280 = vst [vmem:[#allocation2 + $0x28] sm:$0xff] %v248
    %281 = vst [vmem:[#allocation2 + $0x30] sm:$0xff] %v182
    %282 = vst [vmem:[#allocation2 + $0x38] sm:$0xff] %v184
    %283 = vst [vmem:[#allocation2 + $0x40] sm:$0xff] %v253
    %284 = vst [vmem:[#allocation2 + $0x48] sm:$0xff] %v186
    %285 = vst [vmem:[#allocation2 + $0x50] sm:$0xff] %v188
    %286 = vst [vmem:[#allocation2 + $0x58] sm:$0xff] %v256
    %287 = vst [vmem:[#allocation2 + $0x60] sm:$0xff] %v192
    %288 = vst [vmem:[#allocation2 + $0x68] sm:$0xff] %v194
    %289 = vst [vmem:[#allocation2 + $0x70] sm:$0xff] %v261
    %290 = vst [vmem:[#allocation2 + $0x78] sm:$0xff] %v196
    %291 = vst [vmem:[#allocation2 + $0x80] sm:$0xff] %v198
    %292 = vst [vmem:[#allocation2 + $0x88] sm:$0xff] %v264
    %293 = vst [vmem:[#allocation2 + $0x90] sm:$0xff] %v202
    %294 = vst [vmem:[#allocation2 + $0x98] sm:$0xff] %v204
    %295 = vst [vmem:[#allocation2 + $0xa0] sm:$0xff] %v269
    %296 = vst [vmem:[#allocation2 + $0xa8] sm:$0xff] %v206
    %297 = vst [vmem:[#allocation2 + $0xb0] sm:$0xff] %v208
    %298 = vst [vmem:[#allocation2 + $0xb8] sm:$0xff] %v272
    %v299 = vld [vmem:[#allocation3] sm:$0xff]
    %v300 = vld [vmem:[#allocation3 + $0x8] sm:$0xf]
    %v301 = vld [vmem:[#allocation3 + $0xc] sm:$0xff]
    %v302 = vld [vmem:[#allocation3 + $0x14] sm:$0xf]
    %v303 = vld [vmem:[#allocation3 + $0x18] sm:$0xff]
    %v304 = vld [vmem:[#allocation3 + $0x20] sm:$0xf]
    %v305 = vld [vmem:[#allocation3 + $0x24] sm:$0xff]
    %v306 = vld [vmem:[#allocation3 + $0x2c] sm:$0xf]
    %v307 = vld [vmem:[#allocation3 + $0x30] sm:$0xff]
    %v308 = vld [vmem:[#allocation3 + $0x38] sm:$0xf]
    %v309 = vld [vmem:[#allocation3 + $0x3c] sm:$0xff]
    %v310 = vld [vmem:[#allocation3 + $0x44] sm:$0xf]
    %v311 = vld [vmem:[#allocation3 + $0x48] sm:$0xff]
    %v312 = vld [vmem:[#allocation3 + $0x50] sm:$0xf]
    %v313 = vld [vmem:[#allocation3 + $0x54] sm:$0xff]
    %v314 = vld [vmem:[#allocation3 + $0x5c] sm:$0xf]
    %v315 = vld [vmem:[#allocation3 + $0x60] sm:$0xff]
    %v316 = vld [vmem:[#allocation3 + $0x68] sm:$0xf]
    %v317 = vld [vmem:[#allocation3 + $0x6c] sm:$0xff]
    %v318 = vld [vmem:[#allocation3 + $0x74] sm:$0xf]
    %v319 = vld [vmem:[#allocation3 + $0x78] sm:$0xff]
    %v320 = vld [vmem:[#allocation3 + $0x80] sm:$0xf]
    %v321 = vld [vmem:[#allocation3 + $0x84] sm:$0xff]
    %v322 = vld [vmem:[#allocation3 + $0x8c] sm:$0xf]
    %v323 = vld [vmem:[#allocation3 + $0x90] sm:$0xff]
    %v324 = vld [vmem:[#allocation3 + $0x98] sm:$0xf]
    %v325 = vld [vmem:[#allocation3 + $0x9c] sm:$0xff]
    %v326 = vld [vmem:[#allocation3 + $0xa4] sm:$0xf]
    %v327 = vld [vmem:[#allocation3 + $0xa8] sm:$0xff]
    %v328 = vld [vmem:[#allocation3 + $0xb0] sm:$0xf]
    %v329 = vld [vmem:[#allocation3 + $0xb4] sm:$0xff]
    %v330 = vld [vmem:[#allocation3 + $0xbc] sm:$0xf]
    %v331 = vld [vmem:[%s4] sm:$0x1]
    %v332 = vld [vmem:[%s5] sm:$0xff]
    %s333 = smul.u32 0, 3
    %s334 = smul.addr %s333, 8
    %s335 = scalar_lea.vmem [#allocation2], %s334
    %v336 = vld [vmem:[%s335] sm:$0xff]
    %v337 = vld [vmem:[%s335 + $0x8] sm:$0xff]
    %v338 = vld [vmem:[%s335 + $0x10] sm:$0xff]
    %v371 = vunpack.c.l.b16 %v299
    %v372 = vunpack.c.h.b16 %v299
    %v373 = vunpack.c.l.b16 %v300
    %v374 = vunpack.c.l.b16 %v301
    %v375 = vunpack.c.h.b16 %v301
    %v376 = vunpack.c.l.b16 %v302
    %v377 = vunpack.c.l.b16 %v303
    %v378 = vunpack.c.h.b16 %v303
    %v379 = vunpack.c.l.b16 %v304
    %v380 = vunpack.c.l.b16 %v305
    %v381 = vunpack.c.h.b16 %v305
    %v382 = vunpack.c.l.b16 %v306
    %v383 = vunpack.c.l.b16 %v307
    %v384 = vunpack.c.h.b16 %v307
    %v385 = vunpack.c.l.b16 %v308
    %v386 = vunpack.c.l.b16 %v309
    %v387 = vunpack.c.h.b16 %v309
    %v388 = vunpack.c.l.b16 %v310
    %v389 = vunpack.c.l.b16 %v311
    %v390 = vunpack.c.h.b16 %v311
    %v391 = vunpack.c.l.b16 %v312
    %v392 = vunpack.c.l.b16 %v313
    %v393 = vunpack.c.h.b16 %v313
    %v394 = vunpack.c.l.b16 %v314
    %v395 = vunpack.c.l.b16 %v315
    %v396 = vunpack.c.h.b16 %v315
    %v397 = vunpack.c.l.b16 %v316
    %v398 = vunpack.c.l.b16 %v317
    %v399 = vunpack.c.h.b16 %v317
    %v400 = vunpack.c.l.b16 %v318
    %v401 = vunpack.c.l.b16 %v319
    %v402 = vunpack.c.h.b16 %v319
    %v403 = vunpack.c.l.b16 %v320
    %v404 = vunpack.c.l.b16 %v321
    %v405 = vunpack.c.h.b16 %v321
    %v406 = vunpack.c.l.b16 %v322
    %v407 = vunpack.c.l.b16 %v323
    %v408 = vunpack.c.h.b16 %v323
    %v409 = vunpack.c.l.b16 %v324
    %v410 = vunpack.c.l.b16 %v325
    %v411 = vunpack.c.h.b16 %v325
    %v412 = vunpack.c.l.b16 %v326
    %v413 = vunpack.c.l.b16 %v327
    %v414 = vunpack.c.h.b16 %v327
    %v415 = vunpack.c.l.b16 %v328
    %v416 = vunpack.c.l.b16 %v329
    %v417 = vunpack.c.h.b16 %v329
    %v418 = vunpack.c.l.b16 %v330
    %v419 = vpack.c.b16 %v374, %v371
    %v420 = vpack.c.b16 %v375, %v372
    %v421 = vpack.c.b16 %v376, %v373
    %v422 = vpack.c.b16 %v380, %v377
    %v423 = vpack.c.b16 %v381, %v378
    %v424 = vpack.c.b16 %v382, %v379
    %v425 = vpack.c.b16 %v386, %v383
    %v426 = vpack.c.b16 %v387, %v384
    %v427 = vpack.c.b16 %v388, %v385
    %v428 = vpack.c.b16 %v392, %v389
    %v429 = vpack.c.b16 %v393, %v390
    %v430 = vpack.c.b16 %v394, %v391
    %v431 = vpack.c.b16 %v398, %v395
    %v432 = vpack.c.b16 %v399, %v396
    %v433 = vpack.c.b16 %v400, %v397
    %v434 = vpack.c.b16 %v404, %v401
    %v435 = vpack.c.b16 %v405, %v402
    %v436 = vpack.c.b16 %v406, %v403
    %v437 = vpack.c.b16 %v410, %v407
    %v438 = vpack.c.b16 %v411, %v408
    %v439 = vpack.c.b16 %v412, %v409
    %v440 = vpack.c.b16 %v416, %v413
    %v441 = vpack.c.b16 %v417, %v414
    %v442 = vpack.c.b16 %v418, %v415
    %467 = vmatprep.subr.bf16.mxu0 %v420
    %468 = vmatpush1.bf16.msra.mxu0 %v419
    %469 = vmatprep.subr.bf16.mxu0 %v423
    %470 = vmatpush1.bf16.msra.mxu0 %v422
    %471 = vmatprep.subr.bf16.mxu0 %v426
    %472 = vmatpush1.bf16.msra.mxu0 %v425
    %473 = vmatprep.subr.bf16.mxu0 %v429
    %474 = vmatpush1.bf16.msra.mxu0 %v428
    %475 = vmatprep.subr.bf16.mxu0 %v432
    %476 = vmatpush1.bf16.msra.mxu0 %v431
    %477 = vmatprep.subr.bf16.mxu0 %v435
    %478 = vmatpush1.bf16.msra.mxu0 %v434
    %479 = vmatprep.subr.bf16.mxu0 %v438
    %480 = vmatpush1.bf16.msra.mxu0 %v437
    %481 = vmatprep.subr.bf16.mxu0 %v441
    %482 = vmatpush1.bf16.msra.mxu0 %v440
    %483 = vmatprep.subr.bf16.mxu0 0
    %484 = vmatpush1.bf16.msra.mxu0 0
    %485 = vmatprep.subr.bf16.mxu0 0
    %486 = vmatpush1.bf16.msra.mxu0 0
    %487 = vmatprep.subr.bf16.mxu0 0
    %488 = vmatpush1.bf16.msra.mxu0 0
    %489 = vmatprep.subr.bf16.mxu0 0
    %490 = vmatpush1.bf16.msra.mxu0 0
    %491 = vmatprep.subr.bf16.mxu0 0
    %492 = vmatpush1.bf16.msra.mxu0 0
    %493 = vmatprep.subr.bf16.mxu0 0
    %494 = vmatpush1.bf16.msra.mxu0 0
    %495 = vmatprep.subr.bf16.mxu0 0
    %496 = vmatpush1.bf16.msra.mxu0 0
    %497 = vmatprep.subr.bf16.mxu0 0
    %498 = vmatpush1.bf16.msra.mxu0 0
    %499 = vmatprep.mubr.bf16.mxu0 0
    %500 = vmatmul.mubr.bf16.gmra.mrb[0].mxu0 0
    %v501 = vpop.f32.mrb[0].mxu0
    %v502 = vadd.f32 0.0, %v501
    %v503 = vpop.f32.mrb[0].mxu0
    %v504 = vadd.f32 0.0, %v503
    %v505 = vpop.f32.mrb[0].mxu0
    %v506 = vpop.f32.mrb[0].mxu0
    %507 = vdwg.mxu0
    %508 = vmatprep.subr.bf16.mxu0 0
    %509 = vmatpush1.bf16.msra.mxu0 %v421
    %510 = vmatprep.subr.bf16.mxu0 0
    %511 = vmatpush1.bf16.msra.mxu0 %v424
    %512 = vmatprep.subr.bf16.mxu0 0
    %513 = vmatpush1.bf16.msra.mxu0 %v427
    %514 = vmatprep.subr.bf16.mxu0 0
    %515 = vmatpush1.bf16.msra.mxu0 %v430
    %516 = vmatprep.subr.bf16.mxu0 0
    %517 = vmatpush1.bf16.msra.mxu0 %v433
    %518 = vmatprep.subr.bf16.mxu0 0
    %519 = vmatpush1.bf16.msra.mxu0 %v436
    %520 = vmatprep.subr.bf16.mxu0 0
    %521 = vmatpush1.bf16.msra.mxu0 %v439
    %522 = vmatprep.subr.bf16.mxu0 0
    %523 = vmatpush1.bf16.msra.mxu0 %v442
    %524 = vmatprep.subr.bf16.mxu0 0
    %525 = vmatpush1.bf16.msra.mxu0 0
    %526 = vmatprep.subr.bf16.mxu0 0
    %527 = vmatpush1.bf16.msra.mxu0 0
    %528 = vmatprep.subr.bf16.mxu0 0
    %529 = vmatpush1.bf16.msra.mxu0 0
    %530 = vmatprep.subr.bf16.mxu0 0
    %531 = vmatpush1.bf16.msra.mxu0 0
    %532 = vmatprep.subr.bf16.mxu0 0
    %533 = vmatpush1.bf16.msra.mxu0 0
    %534 = vmatprep.subr.bf16.mxu0 0
    %535 = vmatpush1.bf16.msra.mxu0 0
    %536 = vmatprep.subr.bf16.mxu0 0
    %537 = vmatpush1.bf16.msra.mxu0 0
    %538 = vmatprep.subr.bf16.mxu0 0
    %539 = vmatpush1.bf16.msra.mxu0 0
    %540 = vmatprep.mubr.bf16.mxu0 0
    %541 = vmatmul.mubr.bf16.gmra.mrb[0].mxu0 0
    %v542 = vpop.f32.mrb[0].mxu0
    %v543 = vadd.f32 0.0, %v542
    %v544 = vpop.f32.mrb[0].mxu0
    %v545 = vpop.f32.mrb[0].mxu0
    %v546 = vpop.f32.mrb[0].mxu0
    %547 = vdwg.mxu0
    %v548 = vadd.f32 %v336, %v502
    %v549 = vxor.u32 %v548, 2147483648
    %v550 = vmul.f32 %v549, 1.442695
    %v551 = vpow.pop %v550
    %v552 = vadd.f32 %v551, 1.0
    %v553 = vrcp.pop %v552
    %v554 = vmul.f32 1.0, %v553
    %v555 = vadd.f32 %v337, %v504
    %v556 = vxor.u32 %v555, 2147483648
    %v557 = vmul.f32 %v556, 1.442695
    %v558 = vpow.pop %v557
    %v559 = vadd.f32 %v558, 1.0
    %v560 = vrcp.pop %v559
    %v561 = vmul.f32 1.0, %v560
    %v563 = vlaneseq
    %v564 = vshrl.u32 %v563, 7
    %v565 = vsub.s32 0, %v564
    %v566 = vrot.slane %v331, %v565
    %v568 = vadd.f32 %v543, %v566
    %v569 = vmul.f32 %v554, %v568
    %v570 = vadd.f32 %v338, %v569
    %v571 = vtanh.pop %v570
    %v572 = vsub.f32 1.0, %v561
    %v573 = vmul.f32 %v572, %v571
    %v574 = vmul.f32 %v561, 0.0
    %v575 = vadd.f32 %v573, %v574
    %vm576 = vcmp.gt.s32.totalorder %v332, 0
    %v577 = vsel %vm576, %v575, 0.0
    %s578 = smul.u32 1, 3
    %s579 = smul.addr %s578, 8
    %s580 = scalar_lea.vmem [#allocation2], %s579
    %v581 = vld [vmem:[%s580] sm:$0xff]
    %v582 = vld [vmem:[%s580 + $0x8] sm:$0xff]
    %v583 = vld [vmem:[%s580 + $0x10] sm:$0xff]
    %v584 = vpack.c.bf16 %v577, %v577
    %585 = vmatprep.subr.bf16.mxu0 %v420
    %586 = vmatpush1.bf16.msra.mxu0 %v419
    %587 = vmatprep.subr.bf16.mxu0 %v423
    %588 = vmatpush1.bf16.msra.mxu0 %v422
    %589 = vmatprep.subr.bf16.mxu0 %v426
    %590 = vmatpush1.bf16.msra.mxu0 %v425
    %591 = vmatprep.subr.bf16.mxu0 %v429
    %592 = vmatpush1.bf16.msra.mxu0 %v428
    %593 = vmatprep.subr.bf16.mxu0 %v432
    %594 = vmatpush1.bf16.msra.mxu0 %v431
    %595 = vmatprep.subr.bf16.mxu0 %v435
    %596 = vmatpush1.bf16.msra.mxu0 %v434
    %597 = vmatprep.subr.bf16.mxu0 %v438
    %598 = vmatpush1.bf16.msra.mxu0 %v437
    %599 = vmatprep.subr.bf16.mxu0 %v441
    %600 = vmatpush1.bf16.msra.mxu0 %v440
    %601 = vmatprep.subr.bf16.mxu0 0
    %602 = vmatpush1.bf16.msra.mxu0 0
    %603 = vmatprep.subr.bf16.mxu0 0
    %604 = vmatpush1.bf16.msra.mxu0 0
    %605 = vmatprep.subr.bf16.mxu0 0
    %606 = vmatpush1.bf16.msra.mxu0 0
    %607 = vmatprep.subr.bf16.mxu0 0
    %608 = vmatpush1.bf16.msra.mxu0 0
    %609 = vmatprep.subr.bf16.mxu0 0
    %610 = vmatpush1.bf16.msra.mxu0 0
    %611 = vmatprep.subr.bf16.mxu0 0
    %612 = vmatpush1.bf16.msra.mxu0 0
    %613 = vmatprep.subr.bf16.mxu0 0
    %614 = vmatpush1.bf16.msra.mxu0 0
    %615 = vmatprep.subr.bf16.mxu0 0
    %616 = vmatpush1.bf16.msra.mxu0 0
    %617 = vmatprep.mubr.bf16.mxu0 0
    %618 = vmatmul.mubr.bf16.gmra.mrb[0].mxu0 %v584
    %v619 = vpop.f32.mrb[0].mxu0
    %v620 = vadd.f32 0.0, %v619
    %v621 = vpop.f32.mrb[0].mxu0
    %v622 = vadd.f32 0.0, %v621
    %v623 = vpop.f32.mrb[0].mxu0
    %v624 = vpop.f32.mrb[0].mxu0
    %625 = vdwg.mxu0
    %626 = vmatprep.subr.bf16.mxu0 0
    %627 = vmatpush1.bf16.msra.mxu0 %v421
    %628 = vmatprep.subr.bf16.mxu0 0
    %629 = vmatpush1.bf16.msra.mxu0 %v424
    %630 = vmatprep.subr.bf16.mxu0 0
    %631 = vmatpush1.bf16.msra.mxu0 %v427
    %632 = vmatprep.subr.bf16.mxu0 0
    %633 = vmatpush1.bf16.msra.mxu0 %v430
    %634 = vmatprep.subr.bf16.mxu0 0
    %635 = vmatpush1.bf16.msra.mxu0 %v433
    %636 = vmatprep.subr.bf16.mxu0 0
    %637 = vmatpush1.bf16.msra.mxu0 %v436
    %638 = vmatprep.subr.bf16.mxu0 0
    %639 = vmatpush1.bf16.msra.mxu0 %v439
    %640 = vmatprep.subr.bf16.mxu0 0
    %641 = vmatpush1.bf16.msra.mxu0 %v442
    %642 = vmatprep.subr.bf16.mxu0 0
    %643 = vmatpush1.bf16.msra.mxu0 0
    %644 = vmatprep.subr.bf16.mxu0 0
    %645 = vmatpush1.bf16.msra.mxu0 0
    %646 = vmatprep.subr.bf16.mxu0 0
    %647 = vmatpush1.bf16.msra.mxu0 0
    %648 = vmatprep.subr.bf16.mxu0 0
    %649 = vmatpush1.bf16.msra.mxu0 0
    %650 = vmatprep.subr.bf16.mxu0 0
    %651 = vmatpush1.bf16.msra.mxu0 0
    %652 = vmatprep.subr.bf16.mxu0 0
    %653 = vmatpush1.bf16.msra.mxu0 0
    %654 = vmatprep.subr.bf16.mxu0 0
    %655 = vmatpush1.bf16.msra.mxu0 0
    %656 = vmatprep.subr.bf16.mxu0 0
    %657 = vmatpush1.bf16.msra.mxu0 0
    %658 = vmatprep.mubr.bf16.mxu0 0
    %659 = vmatmul.mubr.bf16.gmra.mrb[0].mxu0 %v584
    %v660 = vpop.f32.mrb[0].mxu0
    %v661 = vadd.f32 0.0, %v660
    %v662 = vpop.f32.mrb[0].mxu0
    %v663 = vpop.f32.mrb[0].mxu0
    %v664 = vpop.f32.mrb[0].mxu0
    %665 = vdwg.mxu0
    %v666 = vadd.f32 %v581, %v620
    %v667 = vxor.u32 %v666, 2147483648
    %v668 = vmul.f32 %v667, 1.442695
    %v669 = vpow.pop %v668
    %v670 = vadd.f32 %v669, 1.0
    %v671 = vrcp.pop %v670
    %v672 = vmul.f32 1.0, %v671
    %v673 = vadd.f32 %v582, %v622
    %v674 = vxor.u32 %v673, 2147483648
    %v675 = vmul.f32 %v674, 1.442695
    %v676 = vpow.pop %v675
    %v677 = vadd.f32 %v676, 1.0
    %v678 = vrcp.pop %v677
    %v679 = vmul.f32 1.0, %v678
    %v680 = vadd.f32 %v661, %v566
    %v681 = vmul.f32 %v672, %v680
    %v682 = vadd.f32 %v583, %v681
    %v683 = vtanh.pop %v682
    %v684 = vsub.f32 1.0, %v679
    %v685 = vmul.f32 %v684, %v683
    %v686 = vmul.f32 %v679, %v577
    %v687 = vadd.f32 %v685, %v686
    %vm688 = vcmp.gt.s32.totalorder %v332, 1
    %v689 = vsel %vm688, %v687, %v577
    %v690 = vsel %vm688, %v687, 0.0
    %v691 = vmax.f32 %v577, %v690
    %s692 = smul.u32 2, 3
    %s693 = smul.addr %s692, 8
    %s694 = scalar_lea.vmem [#allocation2], %s693
    %v695 = vld [vmem:[%s694] sm:$0xff]
    %v696 = vld [vmem:[%s694 + $0x8] sm:$0xff]
    %v697 = vld [vmem:[%s694 + $0x10] sm:$0xff]
    %v698 = vpack.c.bf16 %v689, %v689
    %699 = vmatprep.subr.bf16.mxu0 %v420
    %700 = vmatpush1.bf16.msra.mxu0 %v419
    %701 = vmatprep.subr.bf16.mxu0 %v423
    %702 = vmatpush1.bf16.msra.mxu0 %v422
    %703 = vmatprep.subr.bf16.mxu0 %v426
    %704 = vmatpush1.bf16.msra.mxu0 %v425
    %705 = vmatprep.subr.bf16.mxu0 %v429
    %706 = vmatpush1.bf16.msra.mxu0 %v428
    %707 = vmatprep.subr.bf16.mxu0 %v432
    %708 = vmatpush1.bf16.msra.mxu0 %v431
    %709 = vmatprep.subr.bf16.mxu0 %v435
    %710 = vmatpush1.bf16.msra.mxu0 %v434
    %711 = vmatprep.subr.bf16.mxu0 %v438
    %712 = vmatpush1.bf16.msra.mxu0 %v437
    %713 = vmatprep.subr.bf16.mxu0 %v441
    %714 = vmatpush1.bf16.msra.mxu0 %v440
    %715 = vmatprep.subr.bf16.mxu0 0
    %716 = vmatpush1.bf16.msra.mxu0 0
    %717 = vmatprep.subr.bf16.mxu0 0
    %718 = vmatpush1.bf16.msra.mxu0 0
    %719 = vmatprep.subr.bf16.mxu0 0
    %720 = vmatpush1.bf16.msra.mxu0 0
    %721 = vmatprep.subr.bf16.mxu0 0
    %722 = vmatpush1.bf16.msra.mxu0 0
    %723 = vmatprep.subr.bf16.mxu0 0
    %724 = vmatpush1.bf16.msra.mxu0 0
    %725 = vmatprep.subr.bf16.mxu0 0
    %726 = vmatpush1.bf16.msra.mxu0 0
    %727 = vmatprep.subr.bf16.mxu0 0
    %728 = vmatpush1.bf16.msra.mxu0 0
    %729 = vmatprep.subr.bf16.mxu0 0
    %730 = vmatpush1.bf16.msra.mxu0 0
    %731 = vmatprep.mubr.bf16.mxu0 0
    %732 = vmatmul.mubr.bf16.gmra.mrb[0].mxu0 %v698
    %v733 = vpop.f32.mrb[0].mxu0
    %v734 = vadd.f32 0.0, %v733
    %v735 = vpop.f32.mrb[0].mxu0
    %v736 = vadd.f32 0.0, %v735
    %v737 = vpop.f32.mrb[0].mxu0
    %v738 = vpop.f32.mrb[0].mxu0
    %739 = vdwg.mxu0
    %740 = vmatprep.subr.bf16.mxu0 0
    %741 = vmatpush1.bf16.msra.mxu0 %v421
    %742 = vmatprep.subr.bf16.mxu0 0
    %743 = vmatpush1.bf16.msra.mxu0 %v424
    %744 = vmatprep.subr.bf16.mxu0 0
    %745 = vmatpush1.bf16.msra.mxu0 %v427
    %746 = vmatprep.subr.bf16.mxu0 0
    %747 = vmatpush1.bf16.msra.mxu0 %v430
    %748 = vmatprep.subr.bf16.mxu0 0
    %749 = vmatpush1.bf16.msra.mxu0 %v433
    %750 = vmatprep.subr.bf16.mxu0 0
    %751 = vmatpush1.bf16.msra.mxu0 %v436
    %752 = vmatprep.subr.bf16.mxu0 0
    %753 = vmatpush1.bf16.msra.mxu0 %v439
    %754 = vmatprep.subr.bf16.mxu0 0
    %755 = vmatpush1.bf16.msra.mxu0 %v442
    %756 = vmatprep.subr.bf16.mxu0 0
    %757 = vmatpush1.bf16.msra.mxu0 0
    %758 = vmatprep.subr.bf16.mxu0 0
    %759 = vmatpush1.bf16.msra.mxu0 0
    %760 = vmatprep.subr.bf16.mxu0 0
    %761 = vmatpush1.bf16.msra.mxu0 0
    %762 = vmatprep.subr.bf16.mxu0 0
    %763 = vmatpush1.bf16.msra.mxu0 0
    %764 = vmatprep.subr.bf16.mxu0 0
    %765 = vmatpush1.bf16.msra.mxu0 0
    %766 = vmatprep.subr.bf16.mxu0 0
    %767 = vmatpush1.bf16.msra.mxu0 0
    %768 = vmatprep.subr.bf16.mxu0 0
    %769 = vmatpush1.bf16.msra.mxu0 0
    %770 = vmatprep.subr.bf16.mxu0 0
    %771 = vmatpush1.bf16.msra.mxu0 0
    %772 = vmatprep.mubr.bf16.mxu0 0
    %773 = vmatmul.mubr.bf16.gmra.mrb[0].mxu0 %v698
    %v774 = vpop.f32.mrb[0].mxu0
    %v775 = vadd.f32 0.0, %v774
    %v776 = vpop.f32.mrb[0].mxu0
    %v777 = vpop.f32.mrb[0].mxu0
    %v778 = vpop.f32.mrb[0].mxu0
    %779 = vdwg.mxu0
    %v780 = vadd.f32 %v695, %v734
    %v781 = vxor.u32 %v780, 2147483648
    %v782 = vmul.f32 %v781, 1.442695
    %v783 = vpow.pop %v782
    %v784 = vadd.f32 %v783, 1.0
    %v785 = vrcp.pop %v784
    %v786 = vmul.f32 1.0, %v785
    %v787 = vadd.f32 %v696, %v736
    %v788 = vxor.u32 %v787, 2147483648
    %v789 = vmul.f32 %v788, 1.442695
    %v790 = vpow.pop %v789
    %v791 = vadd.f32 %v790, 1.0
    %v792 = vrcp.pop %v791
    %v793 = vmul.f32 1.0, %v792
    %v794 = vadd.f32 %v775, %v566
    %v795 = vmul.f32 %v786, %v794
    %v796 = vadd.f32 %v697, %v795
    %v797 = vtanh.pop %v796
    %v798 = vsub.f32 1.0, %v793
    %v799 = vmul.f32 %v798, %v797
    %v800 = vmul.f32 %v793, %v689
    %v801 = vadd.f32 %v799, %v800
    %vm802 = vcmp.gt.s32.totalorder %v332, 2
    %v803 = vsel %vm802, %v801, %v689
    %v804 = vsel %vm802, %v801, 0.0
    %v805 = vmax.f32 %v691, %v804
    %s806 = smul.u32 3, 3
    %s807 = smul.addr %s806, 8
    %s808 = scalar_lea.vmem [#allocation2], %s807
    %v809 = vld [vmem:[%s808] sm:$0xff]
    %v810 = vld [vmem:[%s808 + $0x8] sm:$0xff]
    %v811 = vld [vmem:[%s808 + $0x10] sm:$0xff]
    %v812 = vpack.c.bf16 %v803, %v803
    %813 = vmatprep.subr.bf16.mxu0 %v420
    %814 = vmatpush1.bf16.msra.mxu0 %v419
    %815 = vmatprep.subr.bf16.mxu0 %v423
    %816 = vmatpush1.bf16.msra.mxu0 %v422
    %817 = vmatprep.subr.bf16.mxu0 %v426
    %818 = vmatpush1.bf16.msra.mxu0 %v425
    %819 = vmatprep.subr.bf16.mxu0 %v429
    %820 = vmatpush1.bf16.msra.mxu0 %v428
    %821 = vmatprep.subr.bf16.mxu0 %v432
    %822 = vmatpush1.bf16.msra.mxu0 %v431
    %823 = vmatprep.subr.bf16.mxu0 %v435
    %824 = vmatpush1.bf16.msra.mxu0 %v434
    %825 = vmatprep.subr.bf16.mxu0 %v438
    %826 = vmatpush1.bf16.msra.mxu0 %v437
    %827 = vmatprep.subr.bf16.mxu0 %v441
    %828 = vmatpush1.bf16.msra.mxu0 %v440
    %829 = vmatprep.subr.bf16.mxu0 0
    %830 = vmatpush1.bf16.msra.mxu0 0
    %831 = vmatprep.subr.bf16.mxu0 0
    %832 = vmatpush1.bf16.msra.mxu0 0
    %833 = vmatprep.subr.bf16.mxu0 0
    %834 = vmatpush1.bf16.msra.mxu0 0
    %835 = vmatprep.subr.bf16.mxu0 0
    %836 = vmatpush1.bf16.msra.mxu0 0
    %837 = vmatprep.subr.bf16.mxu0 0
    %838 = vmatpush1.bf16.msra.mxu0 0
    %839 = vmatprep.subr.bf16.mxu0 0
    %840 = vmatpush1.bf16.msra.mxu0 0
    %841 = vmatprep.subr.bf16.mxu0 0
    %842 = vmatpush1.bf16.msra.mxu0 0
    %843 = vmatprep.subr.bf16.mxu0 0
    %844 = vmatpush1.bf16.msra.mxu0 0
    %845 = vmatprep.mubr.bf16.mxu0 0
    %846 = vmatmul.mubr.bf16.gmra.mrb[0].mxu0 %v812
    %v847 = vpop.f32.mrb[0].mxu0
    %v848 = vadd.f32 0.0, %v847
    %v849 = vpop.f32.mrb[0].mxu0
    %v850 = vadd.f32 0.0, %v849
    %v851 = vpop.f32.mrb[0].mxu0
    %v852 = vpop.f32.mrb[0].mxu0
    %853 = vdwg.mxu0
    %854 = vmatprep.subr.bf16.mxu0 0
    %855 = vmatpush1.bf16.msra.mxu0 %v421
    %856 = vmatprep.subr.bf16.mxu0 0
    %857 = vmatpush1.bf16.msra.mxu0 %v424
    %858 = vmatprep.subr.bf16.mxu0 0
    %859 = vmatpush1.bf16.msra.mxu0 %v427
    %860 = vmatprep.subr.bf16.mxu0 0
    %861 = vmatpush1.bf16.msra.mxu0 %v430
    %862 = vmatprep.subr.bf16.mxu0 0
    %863 = vmatpush1.bf16.msra.mxu0 %v433
    %864 = vmatprep.subr.bf16.mxu0 0
    %865 = vmatpush1.bf16.msra.mxu0 %v436
    %866 = vmatprep.subr.bf16.mxu0 0
    %867 = vmatpush1.bf16.msra.mxu0 %v439
    %868 = vmatprep.subr.bf16.mxu0 0
    %869 = vmatpush1.bf16.msra.mxu0 %v442
    %870 = vmatprep.subr.bf16.mxu0 0
    %871 = vmatpush1.bf16.msra.mxu0 0
    %872 = vmatprep.subr.bf16.mxu0 0
    %873 = vmatpush1.bf16.msra.mxu0 0
    %874 = vmatprep.subr.bf16.mxu0 0
    %875 = vmatpush1.bf16.msra.mxu0 0
    %876 = vmatprep.subr.bf16.mxu0 0
    %877 = vmatpush1.bf16.msra.mxu0 0
    %878 = vmatprep.subr.bf16.mxu0 0
    %879 = vmatpush1.bf16.msra.mxu0 0
    %880 = vmatprep.subr.bf16.mxu0 0
    %881 = vmatpush1.bf16.msra.mxu0 0
    %882 = vmatprep.subr.bf16.mxu0 0
    %883 = vmatpush1.bf16.msra.mxu0 0
    %884 = vmatprep.subr.bf16.mxu0 0
    %885 = vmatpush1.bf16.msra.mxu0 0
    %886 = vmatprep.mubr.bf16.mxu0 0
    %887 = vmatmul.mubr.bf16.gmra.mrb[0].mxu0 %v812
    %v888 = vpop.f32.mrb[0].mxu0
    %v889 = vadd.f32 0.0, %v888
    %v890 = vpop.f32.mrb[0].mxu0
    %v891 = vpop.f32.mrb[0].mxu0
    %v892 = vpop.f32.mrb[0].mxu0
    %893 = vdwg.mxu0
    %v894 = vadd.f32 %v809, %v848
    %v895 = vxor.u32 %v894, 2147483648
    %v896 = vmul.f32 %v895, 1.442695
    %v897 = vpow.pop %v896
    %v898 = vadd.f32 %v897, 1.0
    %v899 = vrcp.pop %v898
    %v900 = vmul.f32 1.0, %v899
    %v901 = vadd.f32 %v810, %v850
    %v902 = vxor.u32 %v901, 2147483648
    %v903 = vmul.f32 %v902, 1.442695
    %v904 = vpow.pop %v903
    %v905 = vadd.f32 %v904, 1.0
    %v906 = vrcp.pop %v905
    %v907 = vmul.f32 1.0, %v906
    %v908 = vadd.f32 %v889, %v566
    %v909 = vmul.f32 %v900, %v908
    %v910 = vadd.f32 %v811, %v909
    %v911 = vtanh.pop %v910
    %v912 = vsub.f32 1.0, %v907
    %v913 = vmul.f32 %v912, %v911
    %v914 = vmul.f32 %v907, %v803
    %v915 = vadd.f32 %v913, %v914
    %vm916 = vcmp.gt.s32.totalorder %v332, 3
    %v917 = vsel %vm916, %v915, %v803
    %v918 = vsel %vm916, %v915, 0.0
    %v919 = vmax.f32 %v805, %v918
    %s920 = smul.u32 4, 3
    %s921 = smul.addr %s920, 8
    %s922 = scalar_lea.vmem [#allocation2], %s921
    %v923 = vld [vmem:[%s922] sm:$0xff]
    %v924 = vld [vmem:[%s922 + $0x8] sm:$0xff]
    %v925 = vld [vmem:[%s922 + $0x10] sm:$0xff]
    %v926 = vpack.c.bf16 %v917, %v917
    %927 = vmatprep.subr.bf16.mxu0 %v420
    %928 = vmatpush1.bf16.msra.mxu0 %v419
    %929 = vmatprep.subr.bf16.mxu0 %v423
    %930 = vmatpush1.bf16.msra.mxu0 %v422
    %931 = vmatprep.subr.bf16.mxu0 %v426
    %932 = vmatpush1.bf16.msra.mxu0 %v425
    %933 = vmatprep.subr.bf16.mxu0 %v429
    %934 = vmatpush1.bf16.msra.mxu0 %v428
    %935 = vmatprep.subr.bf16.mxu0 %v432
    %936 = vmatpush1.bf16.msra.mxu0 %v431
    %937 = vmatprep.subr.bf16.mxu0 %v435
    %938 = vmatpush1.bf16.msra.mxu0 %v434
    %939 = vmatprep.subr.bf16.mxu0 %v438
    %940 = vmatpush1.bf16.msra.mxu0 %v437
    %941 = vmatprep.subr.bf16.mxu0 %v441
    %942 = vmatpush1.bf16.msra.mxu0 %v440
    %943 = vmatprep.subr.bf16.mxu0 0
    %944 = vmatpush1.bf16.msra.mxu0 0
    %945 = vmatprep.subr.bf16.mxu0 0
    %946 = vmatpush1.bf16.msra.mxu0 0
    %947 = vmatprep.subr.bf16.mxu0 0
    %948 = vmatpush1.bf16.msra.mxu0 0
    %949 = vmatprep.subr.bf16.mxu0 0
    %950 = vmatpush1.bf16.msra.mxu0 0
    %951 = vmatprep.subr.bf16.mxu0 0
    %952 = vmatpush1.bf16.msra.mxu0 0
    %953 = vmatprep.subr.bf16.mxu0 0
    %954 = vmatpush1.bf16.msra.mxu0 0
    %955 = vmatprep.subr.bf16.mxu0 0
    %956 = vmatpush1.bf16.msra.mxu0 0
    %957 = vmatprep.subr.bf16.mxu0 0
    %958 = vmatpush1.bf16.msra.mxu0 0
    %959 = vmatprep.mubr.bf16.mxu0 0
    %960 = vmatmul.mubr.bf16.gmra.mrb[0].mxu0 %v926
    %v961 = vpop.f32.mrb[0].mxu0
    %v962 = vadd.f32 0.0, %v961
    %v963 = vpop.f32.mrb[0].mxu0
    %v964 = vadd.f32 0.0, %v963
    %v965 = vpop.f32.mrb[0].mxu0
    %v966 = vpop.f32.mrb[0].mxu0
    %967 = vdwg.mxu0
    %968 = vmatprep.subr.bf16.mxu0 0
    %969 = vmatpush1.bf16.msra.mxu0 %v421
    %970 = vmatprep.subr.bf16.mxu0 0
    %971 = vmatpush1.bf16.msra.mxu0 %v424
    %972 = vmatprep.subr.bf16.mxu0 0
    %973 = vmatpush1.bf16.msra.mxu0 %v427
    %974 = vmatprep.subr.bf16.mxu0 0
    %975 = vmatpush1.bf16.msra.mxu0 %v430
    %976 = vmatprep.subr.bf16.mxu0 0
    %977 = vmatpush1.bf16.msra.mxu0 %v433
    %978 = vmatprep.subr.bf16.mxu0 0
    %979 = vmatpush1.bf16.msra.mxu0 %v436
    %980 = vmatprep.subr.bf16.mxu0 0
    %981 = vmatpush1.bf16.msra.mxu0 %v439
    %982 = vmatprep.subr.bf16.mxu0 0
    %983 = vmatpush1.bf16.msra.mxu0 %v442
    %984 = vmatprep.subr.bf16.mxu0 0
    %985 = vmatpush1.bf16.msra.mxu0 0
    %986 = vmatprep.subr.bf16.mxu0 0
    %987 = vmatpush1.bf16.msra.mxu0 0
    %988 = vmatprep.subr.bf16.mxu0 0
    %989 = vmatpush1.bf16.msra.mxu0 0
    %990 = vmatprep.subr.bf16.mxu0 0
    %991 = vmatpush1.bf16.msra.mxu0 0
    %992 = vmatprep.subr.bf16.mxu0 0
    %993 = vmatpush1.bf16.msra.mxu0 0
    %994 = vmatprep.subr.bf16.mxu0 0
    %995 = vmatpush1.bf16.msra.mxu0 0
    %996 = vmatprep.subr.bf16.mxu0 0
    %997 = vmatpush1.bf16.msra.mxu0 0
    %998 = vmatprep.subr.bf16.mxu0 0
    %999 = vmatpush1.bf16.msra.mxu0 0
    %1000 = vmatprep.mubr.bf16.mxu0 0
    %1001 = vmatmul.mubr.bf16.gmra.mrb[0].mxu0 %v926
    %v1002 = vpop.f32.mrb[0].mxu0
    %v1003 = vadd.f32 0.0, %v1002
    %v1004 = vpop.f32.mrb[0].mxu0
    %v1005 = vpop.f32.mrb[0].mxu0
    %v1006 = vpop.f32.mrb[0].mxu0
    %1007 = vdwg.mxu0
    %v1008 = vadd.f32 %v923, %v962
    %v1009 = vxor.u32 %v1008, 2147483648
    %v1010 = vmul.f32 %v1009, 1.442695
    %v1011 = vpow.pop %v1010
    %v1012 = vadd.f32 %v1011, 1.0
    %v1013 = vrcp.pop %v1012
    %v1014 = vmul.f32 1.0, %v1013
    %v1015 = vadd.f32 %v924, %v964
    %v1016 = vxor.u32 %v1015, 2147483648
    %v1017 = vmul.f32 %v1016, 1.442695
    %v1018 = vpow.pop %v1017
    %v1019 = vadd.f32 %v1018, 1.0
    %v1020 = vrcp.pop %v1019
    %v1021 = vmul.f32 1.0, %v1020
    %v1022 = vadd.f32 %v1003, %v566
    %v1023 = vmul.f32 %v1014, %v1022
    %v1024 = vadd.f32 %v925, %v1023
    %v1025 = vtanh.pop %v1024
    %v1026 = vsub.f32 1.0, %v1021
    %v1027 = vmul.f32 %v1026, %v1025
    %v1028 = vmul.f32 %v1021, %v917
    %v1029 = vadd.f32 %v1027, %v1028
    %vm1030 = vcmp.gt.s32.totalorder %v332, 4
    %v1031 = vsel %vm1030, %v1029, %v917
    %v1032 = vsel %vm1030, %v1029, 0.0
    %v1033 = vmax.f32 %v919, %v1032
    %s1034 = smul.u32 5, 3
    %s1035 = smul.addr %s1034, 8
    %s1036 = scalar_lea.vmem [#allocation2], %s1035
    %v1037 = vld [vmem:[%s1036] sm:$0xff]
    %v1038 = vld [vmem:[%s1036 + $0x8] sm:$0xff]
    %v1039 = vld [vmem:[%s1036 + $0x10] sm:$0xff]
    %v1040 = vpack.c.bf16 %v1031, %v1031
    %1041 = vmatprep.subr.bf16.mxu0 %v420
    %1042 = vmatpush1.bf16.msra.mxu0 %v419
    %1043 = vmatprep.subr.bf16.mxu0 %v423
    %1044 = vmatpush1.bf16.msra.mxu0 %v422
    %1045 = vmatprep.subr.bf16.mxu0 %v426
    %1046 = vmatpush1.bf16.msra.mxu0 %v425
    %1047 = vmatprep.subr.bf16.mxu0 %v429
    %1048 = vmatpush1.bf16.msra.mxu0 %v428
    %1049 = vmatprep.subr.bf16.mxu0 %v432
    %1050 = vmatpush1.bf16.msra.mxu0 %v431
    %1051 = vmatprep.subr.bf16.mxu0 %v435
    %1052 = vmatpush1.bf16.msra.mxu0 %v434
    %1053 = vmatprep.subr.bf16.mxu0 %v438
    %1054 = vmatpush1.bf16.msra.mxu0 %v437
    %1055 = vmatprep.subr.bf16.mxu0 %v441
    %1056 = vmatpush1.bf16.msra.mxu0 %v440
    %1057 = vmatprep.subr.bf16.mxu0 0
    %1058 = vmatpush1.bf16.msra.mxu0 0
    %1059 = vmatprep.subr.bf16.mxu0 0
    %1060 = vmatpush1.bf16.msra.mxu0 0
    %1061 = vmatprep.subr.bf16.mxu0 0
    %1062 = vmatpush1.bf16.msra.mxu0 0
    %1063 = vmatprep.subr.bf16.mxu0 0
    %1064 = vmatpush1.bf16.msra.mxu0 0
    %1065 = vmatprep.subr.bf16.mxu0 0
    %1066 = vmatpush1.bf16.msra.mxu0 0
    %1067 = vmatprep.subr.bf16.mxu0 0
    %1068 = vmatpush1.bf16.msra.mxu0 0
    %1069 = vmatprep.subr.bf16.mxu0 0
    %1070 = vmatpush1.bf16.msra.mxu0 0
    %1071 = vmatprep.subr.bf16.mxu0 0
    %1072 = vmatpush1.bf16.msra.mxu0 0
    %1073 = vmatprep.mubr.bf16.mxu0 0
    %1074 = vmatmul.mubr.bf16.gmra.mrb[0].mxu0 %v1040
    %v1075 = vpop.f32.mrb[0].mxu0
    %v1076 = vadd.f32 0.0, %v1075
    %v1077 = vpop.f32.mrb[0].mxu0
    %v1078 = vadd.f32 0.0, %v1077
    %v1079 = vpop.f32.mrb[0].mxu0
    %v1080 = vpop.f32.mrb[0].mxu0
    %1081 = vdwg.mxu0
    %1082 = vmatprep.subr.bf16.mxu0 0
    %1083 = vmatpush1.bf16.msra.mxu0 %v421
    %1084 = vmatprep.subr.bf16.mxu0 0
    %1085 = vmatpush1.bf16.msra.mxu0 %v424
    %1086 = vmatprep.subr.bf16.mxu0 0
    %1087 = vmatpush1.bf16.msra.mxu0 %v427
    %1088 = vmatprep.subr.bf16.mxu0 0
    %1089 = vmatpush1.bf16.msra.mxu0 %v430
    %1090 = vmatprep.subr.bf16.mxu0 0
    %1091 = vmatpush1.bf16.msra.mxu0 %v433
    %1092 = vmatprep.subr.bf16.mxu0 0
    %1093 = vmatpush1.bf16.msra.mxu0 %v436
    %1094 = vmatprep.subr.bf16.mxu0 0
    %1095 = vmatpush1.bf16.msra.mxu0 %v439
    %1096 = vmatprep.subr.bf16.mxu0 0
    %1097 = vmatpush1.bf16.msra.mxu0 %v442
    %1098 = vmatprep.subr.bf16.mxu0 0
    %1099 = vmatpush1.bf16.msra.mxu0 0
    %1100 = vmatprep.subr.bf16.mxu0 0
    %1101 = vmatpush1.bf16.msra.mxu0 0
    %1102 = vmatprep.subr.bf16.mxu0 0
    %1103 = vmatpush1.bf16.msra.mxu0 0
    %1104 = vmatprep.subr.bf16.mxu0 0
    %1105 = vmatpush1.bf16.msra.mxu0 0
    %1106 = vmatprep.subr.bf16.mxu0 0
    %1107 = vmatpush1.bf16.msra.mxu0 0
    %1108 = vmatprep.subr.bf16.mxu0 0
    %1109 = vmatpush1.bf16.msra.mxu0 0
    %1110 = vmatprep.subr.bf16.mxu0 0
    %1111 = vmatpush1.bf16.msra.mxu0 0
    %1112 = vmatprep.subr.bf16.mxu0 0
    %1113 = vmatpush1.bf16.msra.mxu0 0
    %1114 = vmatprep.mubr.bf16.mxu0 0
    %1115 = vmatmul.mubr.bf16.gmra.mrb[0].mxu0 %v1040
    %v1116 = vpop.f32.mrb[0].mxu0
    %v1117 = vadd.f32 0.0, %v1116
    %v1118 = vpop.f32.mrb[0].mxu0
    %v1119 = vpop.f32.mrb[0].mxu0
    %v1120 = vpop.f32.mrb[0].mxu0
    %1121 = vdwg.mxu0
    %v1122 = vadd.f32 %v1037, %v1076
    %v1123 = vxor.u32 %v1122, 2147483648
    %v1124 = vmul.f32 %v1123, 1.442695
    %v1125 = vpow.pop %v1124
    %v1126 = vadd.f32 %v1125, 1.0
    %v1127 = vrcp.pop %v1126
    %v1128 = vmul.f32 1.0, %v1127
    %v1129 = vadd.f32 %v1038, %v1078
    %v1130 = vxor.u32 %v1129, 2147483648
    %v1131 = vmul.f32 %v1130, 1.442695
    %v1132 = vpow.pop %v1131
    %v1133 = vadd.f32 %v1132, 1.0
    %v1134 = vrcp.pop %v1133
    %v1135 = vmul.f32 1.0, %v1134
    %v1136 = vadd.f32 %v1117, %v566
    %v1137 = vmul.f32 %v1128, %v1136
    %v1138 = vadd.f32 %v1039, %v1137
    %v1139 = vtanh.pop %v1138
    %v1140 = vsub.f32 1.0, %v1135
    %v1141 = vmul.f32 %v1140, %v1139
    %v1142 = vmul.f32 %v1135, %v1031
    %v1143 = vadd.f32 %v1141, %v1142
    %vm1144 = vcmp.gt.s32.totalorder %v332, 5
    %v1145 = vsel %vm1144, %v1143, %v1031
    %v1146 = vsel %vm1144, %v1143, 0.0
    %v1147 = vmax.f32 %v1033, %v1146
    %s1148 = smul.u32 6, 3
    %s1149 = smul.addr %s1148, 8
    %s1150 = scalar_lea.vmem [#allocation2], %s1149
    %v1151 = vld [vmem:[%s1150] sm:$0xff]
    %v1152 = vld [vmem:[%s1150 + $0x8] sm:$0xff]
    %v1153 = vld [vmem:[%s1150 + $0x10] sm:$0xff]
    %v1154 = vpack.c.bf16 %v1145, %v1145
    %1155 = vmatprep.subr.bf16.mxu0 %v420
    %1156 = vmatpush1.bf16.msra.mxu0 %v419
    %1157 = vmatprep.subr.bf16.mxu0 %v423
    %1158 = vmatpush1.bf16.msra.mxu0 %v422
    %1159 = vmatprep.subr.bf16.mxu0 %v426
    %1160 = vmatpush1.bf16.msra.mxu0 %v425
    %1161 = vmatprep.subr.bf16.mxu0 %v429
    %1162 = vmatpush1.bf16.msra.mxu0 %v428
    %1163 = vmatprep.subr.bf16.mxu0 %v432
    %1164 = vmatpush1.bf16.msra.mxu0 %v431
    %1165 = vmatprep.subr.bf16.mxu0 %v435
    %1166 = vmatpush1.bf16.msra.mxu0 %v434
    %1167 = vmatprep.subr.bf16.mxu0 %v438
    %1168 = vmatpush1.bf16.msra.mxu0 %v437
    %1169 = vmatprep.subr.bf16.mxu0 %v441
    %1170 = vmatpush1.bf16.msra.mxu0 %v440
    %1171 = vmatprep.subr.bf16.mxu0 0
    %1172 = vmatpush1.bf16.msra.mxu0 0
    %1173 = vmatprep.subr.bf16.mxu0 0
    %1174 = vmatpush1.bf16.msra.mxu0 0
    %1175 = vmatprep.subr.bf16.mxu0 0
    %1176 = vmatpush1.bf16.msra.mxu0 0
    %1177 = vmatprep.subr.bf16.mxu0 0
    %1178 = vmatpush1.bf16.msra.mxu0 0
    %1179 = vmatprep.subr.bf16.mxu0 0
    %1180 = vmatpush1.bf16.msra.mxu0 0
    %1181 = vmatprep.subr.bf16.mxu0 0
    %1182 = vmatpush1.bf16.msra.mxu0 0
    %1183 = vmatprep.subr.bf16.mxu0 0
    %1184 = vmatpush1.bf16.msra.mxu0 0
    %1185 = vmatprep.subr.bf16.mxu0 0
    %1186 = vmatpush1.bf16.msra.mxu0 0
    %1187 = vmatprep.mubr.bf16.mxu0 0
    %1188 = vmatmul.mubr.bf16.gmra.mrb[0].mxu0 %v1154
    %v1189 = vpop.f32.mrb[0].mxu0
    %v1190 = vadd.f32 0.0, %v1189
    %v1191 = vpop.f32.mrb[0].mxu0
    %v1192 = vadd.f32 0.0, %v1191
    %v1193 = vpop.f32.mrb[0].mxu0
    %v1194 = vpop.f32.mrb[0].mxu0
    %1195 = vdwg.mxu0
    %1196 = vmatprep.subr.bf16.mxu0 0
    %1197 = vmatpush1.bf16.msra.mxu0 %v421
    %1198 = vmatprep.subr.bf16.mxu0 0
    %1199 = vmatpush1.bf16.msra.mxu0 %v424
    %1200 = vmatprep.subr.bf16.mxu0 0
    %1201 = vmatpush1.bf16.msra.mxu0 %v427
    %1202 = vmatprep.subr.bf16.mxu0 0
    %1203 = vmatpush1.bf16.msra.mxu0 %v430
    %1204 = vmatprep.subr.bf16.mxu0 0
    %1205 = vmatpush1.bf16.msra.mxu0 %v433
    %1206 = vmatprep.subr.bf16.mxu0 0
    %1207 = vmatpush1.bf16.msra.mxu0 %v436
    %1208 = vmatprep.subr.bf16.mxu0 0
    %1209 = vmatpush1.bf16.msra.mxu0 %v439
    %1210 = vmatprep.subr.bf16.mxu0 0
    %1211 = vmatpush1.bf16.msra.mxu0 %v442
    %1212 = vmatprep.subr.bf16.mxu0 0
    %1213 = vmatpush1.bf16.msra.mxu0 0
    %1214 = vmatprep.subr.bf16.mxu0 0
    %1215 = vmatpush1.bf16.msra.mxu0 0
    %1216 = vmatprep.subr.bf16.mxu0 0
    %1217 = vmatpush1.bf16.msra.mxu0 0
    %1218 = vmatprep.subr.bf16.mxu0 0
    %1219 = vmatpush1.bf16.msra.mxu0 0
    %1220 = vmatprep.subr.bf16.mxu0 0
    %1221 = vmatpush1.bf16.msra.mxu0 0
    %1222 = vmatprep.subr.bf16.mxu0 0
    %1223 = vmatpush1.bf16.msra.mxu0 0
    %1224 = vmatprep.subr.bf16.mxu0 0
    %1225 = vmatpush1.bf16.msra.mxu0 0
    %1226 = vmatprep.subr.bf16.mxu0 0
    %1227 = vmatpush1.bf16.msra.mxu0 0
    %1228 = vmatprep.mubr.bf16.mxu0 0
    %1229 = vmatmul.mubr.bf16.gmra.mrb[0].mxu0 %v1154
    %v1230 = vpop.f32.mrb[0].mxu0
    %v1231 = vadd.f32 0.0, %v1230
    %v1232 = vpop.f32.mrb[0].mxu0
    %v1233 = vpop.f32.mrb[0].mxu0
    %v1234 = vpop.f32.mrb[0].mxu0
    %1235 = vdwg.mxu0
    %v1236 = vadd.f32 %v1151, %v1190
    %v1237 = vxor.u32 %v1236, 2147483648
    %v1238 = vmul.f32 %v1237, 1.442695
    %v1239 = vpow.pop %v1238
    %v1240 = vadd.f32 %v1239, 1.0
    %v1241 = vrcp.pop %v1240
    %v1242 = vmul.f32 1.0, %v1241
    %v1243 = vadd.f32 %v1152, %v1192
    %v1244 = vxor.u32 %v1243, 2147483648
    %v1245 = vmul.f32 %v1244, 1.442695
    %v1246 = vpow.pop %v1245
    %v1247 = vadd.f32 %v1246, 1.0
    %v1248 = vrcp.pop %v1247
    %v1249 = vmul.f32 1.0, %v1248
    %v1250 = vadd.f32 %v1231, %v566
    %v1251 = vmul.f32 %v1242, %v1250
    %v1252 = vadd.f32 %v1153, %v1251
    %v1253 = vtanh.pop %v1252
    %v1254 = vsub.f32 1.0, %v1249
    %v1255 = vmul.f32 %v1254, %v1253
    %v1256 = vmul.f32 %v1249, %v1145
    %v1257 = vadd.f32 %v1255, %v1256
    %vm1258 = vcmp.gt.s32.totalorder %v332, 6
    %v1259 = vsel %vm1258, %v1257, %v1145
    %v1260 = vsel %vm1258, %v1257, 0.0
    %v1261 = vmax.f32 %v1147, %v1260
    %s1262 = smul.u32 7, 3
    %s1263 = smul.addr %s1262, 8
    %s1264 = scalar_lea.vmem [#allocation2], %s1263
    %v1265 = vld [vmem:[%s1264] sm:$0xff]
    %v1266 = vld [vmem:[%s1264 + $0x8] sm:$0xff]
    %v1267 = vld [vmem:[%s1264 + $0x10] sm:$0xff]
    %v1268 = vpack.c.bf16 %v1259, %v1259
    %1269 = vmatprep.subr.bf16.mxu0 %v420
    %1270 = vmatpush1.bf16.msra.mxu0 %v419
    %1271 = vmatprep.subr.bf16.mxu0 %v423
    %1272 = vmatpush1.bf16.msra.mxu0 %v422
    %1273 = vmatprep.subr.bf16.mxu0 %v426
    %1274 = vmatpush1.bf16.msra.mxu0 %v425
    %1275 = vmatprep.subr.bf16.mxu0 %v429
    %1276 = vmatpush1.bf16.msra.mxu0 %v428
    %1277 = vmatprep.subr.bf16.mxu0 %v432
    %1278 = vmatpush1.bf16.msra.mxu0 %v431
    %1279 = vmatprep.subr.bf16.mxu0 %v435
    %1280 = vmatpush1.bf16.msra.mxu0 %v434
    %1281 = vmatprep.subr.bf16.mxu0 %v438
    %1282 = vmatpush1.bf16.msra.mxu0 %v437
    %1283 = vmatprep.subr.bf16.mxu0 %v441
    %1284 = vmatpush1.bf16.msra.mxu0 %v440
    %1285 = vmatprep.subr.bf16.mxu0 0
    %1286 = vmatpush1.bf16.msra.mxu0 0
    %1287 = vmatprep.subr.bf16.mxu0 0
    %1288 = vmatpush1.bf16.msra.mxu0 0
    %1289 = vmatprep.subr.bf16.mxu0 0
    %1290 = vmatpush1.bf16.msra.mxu0 0
    %1291 = vmatprep.subr.bf16.mxu0 0
    %1292 = vmatpush1.bf16.msra.mxu0 0
    %1293 = vmatprep.subr.bf16.mxu0 0
    %1294 = vmatpush1.bf16.msra.mxu0 0
    %1295 = vmatprep.subr.bf16.mxu0 0
    %1296 = vmatpush1.bf16.msra.mxu0 0
    %1297 = vmatprep.subr.bf16.mxu0 0
    %1298 = vmatpush1.bf16.msra.mxu0 0
    %1299 = vmatprep.subr.bf16.mxu0 0
    %1300 = vmatpush1.bf16.msra.mxu0 0
    %1301 = vmatprep.mubr.bf16.mxu0 0
    %1302 = vmatmul.mubr.bf16.gmra.mrb[0].mxu0 %v1268
    %v1303 = vpop.f32.mrb[0].mxu0
    %v1304 = vadd.f32 0.0, %v1303
    %v1305 = vpop.f32.mrb[0].mxu0
    %v1306 = vadd.f32 0.0, %v1305
    %v1307 = vpop.f32.mrb[0].mxu0
    %v1308 = vpop.f32.mrb[0].mxu0
    %1309 = vdwg.mxu0
    %1310 = vmatprep.subr.bf16.mxu0 0
    %1311 = vmatpush1.bf16.msra.mxu0 %v421
    %1312 = vmatprep.subr.bf16.mxu0 0
    %1313 = vmatpush1.bf16.msra.mxu0 %v424
    %1314 = vmatprep.subr.bf16.mxu0 0
    %1315 = vmatpush1.bf16.msra.mxu0 %v427
    %1316 = vmatprep.subr.bf16.mxu0 0
    %1317 = vmatpush1.bf16.msra.mxu0 %v430
    %1318 = vmatprep.subr.bf16.mxu0 0
    %1319 = vmatpush1.bf16.msra.mxu0 %v433
    %1320 = vmatprep.subr.bf16.mxu0 0
    %1321 = vmatpush1.bf16.msra.mxu0 %v436
    %1322 = vmatprep.subr.bf16.mxu0 0
    %1323 = vmatpush1.bf16.msra.mxu0 %v439
    %1324 = vmatprep.subr.bf16.mxu0 0
    %1325 = vmatpush1.bf16.msra.mxu0 %v442
    %1326 = vmatprep.subr.bf16.mxu0 0
    %1327 = vmatpush1.bf16.msra.mxu0 0
    %1328 = vmatprep.subr.bf16.mxu0 0
    %1329 = vmatpush1.bf16.msra.mxu0 0
    %1330 = vmatprep.subr.bf16.mxu0 0
    %1331 = vmatpush1.bf16.msra.mxu0 0
    %1332 = vmatprep.subr.bf16.mxu0 0
    %1333 = vmatpush1.bf16.msra.mxu0 0
    %1334 = vmatprep.subr.bf16.mxu0 0
    %1335 = vmatpush1.bf16.msra.mxu0 0
    %1336 = vmatprep.subr.bf16.mxu0 0
    %1337 = vmatpush1.bf16.msra.mxu0 0
    %1338 = vmatprep.subr.bf16.mxu0 0
    %1339 = vmatpush1.bf16.msra.mxu0 0
    %1340 = vmatprep.subr.bf16.mxu0 0
    %1341 = vmatpush1.bf16.msra.mxu0 0
    %1342 = vmatprep.mubr.bf16.mxu0 0
    %1343 = vmatmul.mubr.bf16.gmra.mrb[0].mxu0 %v1268
    %v1344 = vpop.f32.mrb[0].mxu0
    %v1345 = vadd.f32 0.0, %v1344
    %v1346 = vpop.f32.mrb[0].mxu0
    %v1347 = vpop.f32.mrb[0].mxu0
    %v1348 = vpop.f32.mrb[0].mxu0
    %1349 = vdwg.mxu0
    %v1350 = vadd.f32 %v1265, %v1304
    %v1351 = vxor.u32 %v1350, 2147483648
    %v1352 = vmul.f32 %v1351, 1.442695
    %v1353 = vpow.pop %v1352
    %v1354 = vadd.f32 %v1353, 1.0
    %v1355 = vrcp.pop %v1354
    %v1356 = vmul.f32 1.0, %v1355
    %v1357 = vadd.f32 %v1266, %v1306
    %v1358 = vxor.u32 %v1357, 2147483648
    %v1359 = vmul.f32 %v1358, 1.442695
    %v1360 = vpow.pop %v1359
    %v1361 = vadd.f32 %v1360, 1.0
    %v1362 = vrcp.pop %v1361
    %v1363 = vmul.f32 1.0, %v1362
    %v1364 = vadd.f32 %v1345, %v566
    %v1365 = vmul.f32 %v1356, %v1364
    %v1366 = vadd.f32 %v1267, %v1365
    %v1367 = vtanh.pop %v1366
    %v1368 = vsub.f32 1.0, %v1363
    %v1369 = vmul.f32 %v1368, %v1367
    %v1370 = vmul.f32 %v1363, %v1259
    %v1371 = vadd.f32 %v1369, %v1370
    %vm1372 = vcmp.gt.s32.totalorder %v332, 7
    %v1373 = vsel %vm1372, %v1371, 0.0
    %v1374 = vmax.f32 %v1261, %v1373
    %1375 = vst [vmem:[#allocation6] sm:$0xff] %v1374
    // Predicated region
    $region30: #{tpu_custom_call.1} parent=1 // pred_check
      _
    $region31: #{tpu_custom_call.1} parent=1 // pred_check_branch
      %1377 = sbr.rel (0) target = $region33
    $region32: #{tpu_custom_call.1} parent=1 // pred_region
      %s1379 = ssub.s32 128, 128
      %1380 = vsyncadd [#allocation5], %s1379
      %s1382 = sshll.u32 [#allocation6], 4
      %s1383 = int_to_ptr.vmem [resolvable:$true] %s1382
      %1385 = dma.vmem_to_hbm [thread:$0]  %s1383, 128, %s6, [#allocation5]
    $region33: #{tpu_custom_call.1} parent=1 // pred_fallthru
      _
    // Predicated region
    $region34: #{tpu_custom_call.1} parent=1 // pred_check
      _
    $region35: #{tpu_custom_call.1} parent=1 // pred_check_branch
      %1387 = sbr.rel (0) target = $region37
    $region36: #{tpu_custom_call.1} parent=1 // pred_region
      %1388 = dma.done [#allocation5], 128
    $region37: #{tpu_custom_call.1} parent=1 // pred_fallthru
      _
    %1389 = vsyncpa [#allocation4], 1
    %1390 = vsyncpa [#allocation5], 1

</llo_original>
